<compile_context>
chip_gen: v7x
topology: tpu7x:2x2x1
jax: 0.10.0
libtpu: 0.0.40
codegen_flags: <defaults>
</compile_context>

<pallas_src>
import functools

import jax
import jax.numpy as jnp
from jax.experimental import pallas as pl
from jax.experimental.pallas import tpu as pltpu


# -----------------------------------------------------------------------------
# Fused CBAM kernel: one grid step == one batch element.
# -----------------------------------------------------------------------------
def _cbam_fused_kernel(x_ref, w1_ref, w2_ref, wsa_ref, o_ref, pad_ref,
                       *, H, W, K, P, HW, OFF):
    # x_ref  : (1, C, HW) block, HW lane-dense
    # w1_ref : (Cr, C)   shared-MLP first 1x1-conv weight
    # w2_ref : (C, Cr)   shared-MLP second 1x1-conv weight
    # wsa_ref: SMEM (2, K*K) spatial 7x7 conv weights (avg plane, max plane)
    # pad_ref: VMEM scratch (2, LB) zero-padded flattened avg/max maps
    x = x_ref[0].astype(jnp.float32)                     # (C, HW)
    C = x.shape[0]

    # ---------------- channel attention ----------------
    pooled_avg = jnp.mean(x, axis=1, keepdims=True)      # (C, 1)  AdaptiveAvgPool2d(1)
    pooled_max = jnp.max(x, axis=1, keepdims=True)       # (C, 1)  AdaptiveMaxPool2d(1)
    # stack the two pooled vectors -> run the shared MLP once on (C, 2)
    col = jax.lax.broadcasted_iota(jnp.int32, (C, 2), 1)
    p = jnp.where(col == 0, pooled_avg, pooled_max)      # (C, 2)
    h = jnp.maximum(
        jnp.dot(w1_ref[...], p, preferred_element_type=jnp.float32), 0.0)  # (Cr, 2)
    s = jnp.dot(w2_ref[...], h, preferred_element_type=jnp.float32)        # (C, 2)
    ca = jax.nn.sigmoid(s[:, 0:1] + s[:, 1:2])           # (C, 1)
    y = x * ca                                           # (C, HW) channel-scaled x

    # ---------------- spatial attention ----------------
    am = jnp.mean(y, axis=0, keepdims=True)              # (1, HW) mean over channels
    mm = jnp.max(y, axis=0, keepdims=True)               # (1, HW) max  over channels

    # place the flat maps into a zero-padded flat buffer; a tap (ky, kx) is then
    # a constant lane shift of (ky-P)*W + (kx-P), with out-of-row reads masked.
    pad_ref[...] = jnp.zeros_like(pad_ref)
    pad_ref[0:1, OFF:OFF + HW] = am
    pad_ref[1:2, OFF:OFF + HW] = mm
    buf = pad_ref[...]                                   # (2, LB)

    xcol = jax.lax.broadcasted_iota(jnp.int32, (1, HW), 1) % W
    acc = jnp.zeros((1, HW), jnp.float32)
    for kx in range(K):                                  # fully unrolled 7x7 conv
        part = jnp.zeros((1, HW), jnp.float32)
        for ky in range(K):
            shift = OFF + (ky - P) * W + (kx - P)
            idx = ky * K + kx
            part = part + wsa_ref[0, idx] * buf[0:1, shift:shift + HW]
            part = part + wsa_ref[1, idx] * buf[1:2, shift:shift + HW]
        valid = (xcol >= P - kx) & (xcol < W + P - kx)   # mask depends only on kx
        acc = acc + jnp.where(valid, part, 0.0)
    att = jax.nn.sigmoid(acc)                            # (1, HW)

    o_ref[0] = (y * att).astype(o_ref.dtype)             # lane-dense store


# -----------------------------------------------------------------------------
# Wrapper
# -----------------------------------------------------------------------------
def cbam_pallas(x, w1_conv, w2_conv, w_sa_conv):
    """x: (N, C, H, W); w1_conv: (Cr, C, 1, 1); w2_conv: (C, Cr, 1, 1);
    w_sa_conv: (1, 2, K, K)."""
    N, C, H, W = x.shape
    Cr = w1_conv.shape[0]
    K = w_sa_conv.shape[-1]
    P = K // 2
    HW = H * W

    # flat-buffer geometry for the in-kernel padded 7x7 conv
    OFF = -(-(P * W + P) // 128) * 128                 # aligned placement offset
    LB = -(-(OFF + HW + P * W + P) // 128) * 128       # scratch lane length

    # layout glue: NCHW -> (N, C, HW) is a free, contiguous view (no transpose)
    x_flat = x.reshape(N, C, HW)
    w1 = w1_conv[:, :, 0, 0].astype(jnp.float32)        # (Cr, C)
    w2 = w2_conv[:, :, 0, 0].astype(jnp.float32)        # (C, Cr)
    wsa = w_sa_conv.astype(jnp.float32).reshape(2, K * K)

    kernel = functools.partial(_cbam_fused_kernel,
                               H=H, W=W, K=K, P=P, HW=HW, OFF=OFF)

    out = pl.pallas_call(
        kernel,
        out_shape=jax.ShapeDtypeStruct((N, C, HW), x.dtype),
        grid_spec=pltpu.PrefetchScalarGridSpec(
            num_scalar_prefetch=0,
            grid=(N,),
            in_specs=[
                pl.BlockSpec((1, C, HW), lambda n: (n, 0, 0)),               # x
                pl.BlockSpec((Cr, C), lambda n: (0, 0)),                     # MLP w1
                pl.BlockSpec((C, Cr), lambda n: (0, 0)),                     # MLP w2
                pl.BlockSpec(memory_space=pltpu.MemorySpace.SMEM),           # 7x7 w
            ],
            out_specs=pl.BlockSpec((1, C, HW), lambda n: (n, 0, 0)),
            scratch_shapes=[pltpu.VMEM((2, LB), jnp.float32)],
        ),
        compiler_params=pltpu.CompilerParams(
            dimension_semantics=("parallel",)),          # shard batch over TCs (v7x)
    )(x_flat, w1, w2, wsa)

    return out.reshape(N, C, H, W)


# -----------------------------------------------------------------------------
# Pure-JAX reference (mirrors the PyTorch forward exactly)
# -----------------------------------------------------------------------------
def cbam_reference(x, w1_conv, w2_conv, w_sa_conv):
    w1m = w1_conv[:, :, 0, 0]                           # (Cr, C)
    w2m = w2_conv[:, :, 0, 0]                           # (C, Cr)
    pa = jnp.mean(x, axis=(2, 3))                       # (N, C)
    pm = jnp.max(x, axis=(2, 3))                        # (N, C)

    def mlp(p):
        return jnp.maximum(p @ w1m.T, 0.0) @ w2m.T

    ca = jax.nn.sigmoid(mlp(pa) + mlp(pm))[:, :, None, None]
    x1 = x * ca
    am = jnp.mean(x1, axis=1, keepdims=True)
    mm = jnp.max(x1, axis=1, keepdims=True)
    cat = jnp.concatenate([am, mm], axis=1)             # (N, 2, H, W)
    P = w_sa_conv.shape[-1] // 2
    att = jax.lax.conv_general_dilated(
        cat, w_sa_conv, window_strides=(1, 1), padding=((P, P), (P, P)),
        dimension_numbers=("NCHW", "OIHW", "NCHW"))
    return x1 * jax.nn.sigmoid(att)


if __name__ == "__main__":
    N, C, H, W = 2, 32, 16, 16          # planes=32 -> hidden = 32 // 16 = 2
    ratio = 16
    Cr = C // ratio
    K = 7

    key = jax.random.PRNGKey(0)
    k1, k2, k3, k4 = jax.random.split(key, 4)
    x = jax.random.normal(k1, (N, C, H, W), jnp.float32)
    w1_conv = jax.random.normal(k2, (Cr, C, 1, 1), jnp.float32) * 0.25
    w2_conv = jax.random.normal(k3, (C, Cr, 1, 1), jnp.float32) * 0.25
    w_sa_conv = jax.random.normal(k4, (1, 2, K, K), jnp.float32) * 0.25

    out = cbam_pallas(x, w1_conv, w2_conv, w_sa_conv)
    out = jax.block_until_ready(out)

    ref = cbam_reference(x, w1_conv, w2_conv, w_sa_conv)
    assert out.shape == ref.shape == (N, C, H, W)
    if not jnp.allclose(out, ref, atol=2e-3, rtol=2e-3):
        max_err = float(jnp.max(jnp.abs(out - ref)))
        raise AssertionError(f"Pallas CBAM mismatch vs reference, max abs err = {max_err}")

    print("KERNEL_OK")
</pallas_src>

<mosaic_0001>
module attributes {stable_mosaic.version = 11 : i64} {
  func.func @_cbam_fused_kernel(%arg0: i32, %arg1: memref<1x32x256xf32, #tpu.memory_space<vmem>>, %arg2: memref<2x32xf32, #tpu.memory_space<vmem>>, %arg3: memref<32x2xf32, #tpu.memory_space<vmem>>, %arg4: memref<2x49xf32, #tpu.memory_space<smem>>, %arg5: memref<1x32x256xf32, #tpu.memory_space<vmem>>, %arg6: memref<2x512xf32, #tpu.memory_space<vmem>>) attributes {dimension_semantics = [#tpu.dimension_semantics<parallel>], iteration_bounds = array<i64: 2>, scalar_prefetch = 0 : i64, scratch_operands = 1 : i64, tpu.core_type = #tpu.core_type<tc>, window_params = [{transform_indices = @transform_0, window_bounds = array<i64: 1, 32, 256>}, {pipeline_mode = #tpu.pipeline_mode<synchronous>, transform_indices = @transform_1, window_bounds = array<i64: 2, 32>}, {pipeline_mode = #tpu.pipeline_mode<synchronous>, transform_indices = @transform_2, window_bounds = array<i64: 32, 2>}, {transform_indices = @transform_3, window_bounds = array<i64: 2, 49>}, {transform_indices = @transform_4, window_bounds = array<i64: 1, 32, 256>}]} {
    %c0 = arith.constant 0 : index
    %c0_0 = arith.constant 0 : index
    %c0_1 = arith.constant 0 : index
    %0 = vector.load %arg1[%c0, %c0_0, %c0_1] : memref<1x32x256xf32, #tpu.memory_space<vmem>>, vector<1x32x256xf32>
    %1 = vector.shape_cast %0 : vector<1x32x256xf32> to vector<32x256xf32>
    %cst = arith.constant dense<0.000000e+00> : vector<32xf32>
    %2 = vector.multi_reduction <add>, %1, %cst [1] : vector<32x256xf32> to vector<32xf32>
    %3 = vector.shape_cast %2 : vector<32xf32> to vector<32x1xf32>
    %cst_2 = arith.constant 2.560000e+02 : f32
    %4 = vector.broadcast %cst_2 : f32 to vector<32x1xf32>
    %5 = arith.divf %3, %4 : vector<32x1xf32>
    %cst_3 = arith.constant dense<0xFF800000> : vector<32xf32>
    %6 = vector.multi_reduction <maximumf>, %1, %cst_3 [1] : vector<32x256xf32> to vector<32xf32>
    %7 = vector.shape_cast %6 : vector<32xf32> to vector<32x1xf32>
    %8 = tpu.iota {dimensions = array<i32: 1>} : vector<32x2xi32>
    %c0_i32 = arith.constant 0 : i32
    %9 = vector.broadcast %c0_i32 : i32 to vector<32x2xi32>
    %10 = arith.cmpi eq, %8, %9 : vector<32x2xi32>
    %11 = vector.shape_cast %5 : vector<32x1xf32> to vector<32x1xf32>
    %12 = vector.broadcast %11 : vector<32x1xf32> to vector<32x2xf32>
    %13 = vector.shape_cast %7 : vector<32x1xf32> to vector<32x1xf32>
    %14 = vector.broadcast %13 : vector<32x1xf32> to vector<32x2xf32>
    %15 = arith.select %10, %12, %14 : vector<32x2xi1>, vector<32x2xf32>
    %c0_4 = arith.constant 0 : index
    %c0_5 = arith.constant 0 : index
    %16 = vector.load %arg2[%c0_4, %c0_5] : memref<2x32xf32, #tpu.memory_space<vmem>>, vector<2x32xf32>
    %cst_6 = arith.constant dense<0.000000e+00> : vector<2x2xf32>
    %17 = tpu.matmul %16, %15, %cst_6 {dimension_numbers = #tpu.dot_dimension_numbers<[1], [0], [0], [1], [0, 0, 1, 1], [], []>} : vector<2x32xf32>, vector<32x2xf32>, vector<2x2xf32> -> vector<2x2xf32>
    %cst_7 = arith.constant 0.000000e+00 : f32
    %18 = vector.broadcast %cst_7 : f32 to vector<2x2xf32>
    %19 = arith.maximumf %17, %18 : vector<2x2xf32>
    %c0_8 = arith.constant 0 : index
    %c0_9 = arith.constant 0 : index
    %20 = vector.load %arg3[%c0_8, %c0_9] : memref<32x2xf32, #tpu.memory_space<vmem>>, vector<32x2xf32>
    %cst_10 = arith.constant dense<0.000000e+00> : vector<32x2xf32>
    %21 = tpu.matmul %20, %19, %cst_10 {dimension_numbers = #tpu.dot_dimension_numbers<[1], [0], [0], [1], [0, 0, 1, 1], [], []>} : vector<32x2xf32>, vector<2x2xf32>, vector<32x2xf32> -> vector<32x2xf32>
    %22 = vector.extract_strided_slice %21 {offsets = [0, 0], sizes = [32, 1], strides = [1, 1]} : vector<32x2xf32> to vector<32x1xf32>
    %23 = vector.extract_strided_slice %21 {offsets = [0, 1], sizes = [32, 1], strides = [1, 1]} : vector<32x2xf32> to vector<32x1xf32>
    %24 = arith.addf %22, %23 : vector<32x1xf32>
    %25 = arith.negf %24 : vector<32x1xf32>
    %26 = math.exp %25 : vector<32x1xf32>
    %cst_11 = arith.constant 1.000000e+00 : f32
    %27 = vector.broadcast %cst_11 : f32 to vector<32x1xf32>
    %28 = arith.addf %27, %26 : vector<32x1xf32>
    %29 = arith.divf %27, %28 : vector<32x1xf32>
    %30 = vector.broadcast %29 : vector<32x1xf32> to vector<32x256xf32>
    %31 = arith.mulf %1, %30 : vector<32x256xf32>
    %cst_12 = arith.constant dense<0.000000e+00> : vector<256xf32>
    %32 = vector.multi_reduction <add>, %31, %cst_12 [0] : vector<32x256xf32> to vector<256xf32>
    %33 = vector.shape_cast %32 : vector<256xf32> to vector<1x256xf32>
    %cst_13 = arith.constant 3.200000e+01 : f32
    %34 = vector.broadcast %cst_13 : f32 to vector<1x256xf32>
    %35 = arith.divf %33, %34 : vector<1x256xf32>
    %cst_14 = arith.constant dense<0xFF800000> : vector<256xf32>
    %36 = vector.multi_reduction <maximumf>, %31, %cst_14 [0] : vector<32x256xf32> to vector<256xf32>
    %37 = vector.shape_cast %36 : vector<256xf32> to vector<1x256xf32>
    %cst_15 = arith.constant 0.000000e+00 : f32
    %38 = vector.broadcast %cst_15 : f32 to vector<2x512xf32>
    %c0_16 = arith.constant 0 : index
    %c0_17 = arith.constant 0 : index
    %39 = vector.load %arg6[%c0_16, %c0_17] : memref<2x512xf32, #tpu.memory_space<vmem>>, vector<2x512xf32>
    tpu.vector_store %arg6[%c0_16, %c0_17], %38 {strides = array<i32>} : memref<2x512xf32, #tpu.memory_space<vmem>>, vector<2x512xf32>,
    %c0_18 = arith.constant 0 : index
    %c128 = arith.constant 128 : index
    %40 = vector.load %arg6[%c0_18, %c128] : memref<2x512xf32, #tpu.memory_space<vmem>>, vector<1x256xf32>
    tpu.vector_store %arg6[%c0_18, %c128], %35 {strides = array<i32>} : memref<2x512xf32, #tpu.memory_space<vmem>>, vector<1x256xf32>,
    %c1 = arith.constant 1 : index
    %c128_19 = arith.constant 128 : index
    %41 = vector.load %arg6[%c1, %c128_19] : memref<2x512xf32, #tpu.memory_space<vmem>>, vector<1x256xf32>
    tpu.vector_store %arg6[%c1, %c128_19], %37 {strides = array<i32>} : memref<2x512xf32, #tpu.memory_space<vmem>>, vector<1x256xf32>,
    %c0_20 = arith.constant 0 : index
    %c0_21 = arith.constant 0 : index
    %42 = vector.load %arg6[%c0_20, %c0_21] : memref<2x512xf32, #tpu.memory_space<vmem>>, vector<2x512xf32>
    %43 = tpu.iota {dimensions = array<i32: 1>} : vector<1x256xi32>
    %c16_i32 = arith.constant 16 : i32
    %c0_i32_22 = arith.constant 0 : i32
    %44 = arith.cmpi eq, %c16_i32, %c0_i32_22 : i32
    %c1_i32 = arith.constant 1 : i32
    %45 = arith.select %44, %c1_i32, %c16_i32 : i32
    %46 = vector.broadcast %45 : i32 to vector<1x256xi32>
    %47 = arith.remsi %43, %46 : vector<1x256xi32>
    %c0_i32_23 = arith.constant 0 : i32
    %48 = vector.broadcast %c0_i32_23 : i32 to vector<1x256xi32>
    %49 = arith.cmpi ne, %47, %48 : vector<1x256xi32>
    %c0_i32_24 = arith.constant 0 : i32
    %50 = vector.broadcast %c0_i32_24 : i32 to vector<1x256xi32>
    %51 = arith.cmpi slt, %47, %50 : vector<1x256xi32>
    %c0_i32_25 = arith.constant 0 : i32
    %52 = arith.cmpi slt, %45, %c0_i32_25 : i32
    %53 = vector.broadcast %52 : i1 to vector<1x256xi1>
    %54 = vector.broadcast %53 : vector<1x256xi1> to vector<1x256xi1>
    %55 = arith.xori %51, %54 : vector<1x256xi1>
    %56 = arith.andi %55, %49 : vector<1x256xi1>
    %57 = vector.broadcast %45 : i32 to vector<1x256xi32>
    %58 = arith.addi %47, %57 : vector<1x256xi32>
    %59 = arith.select %56, %58, %47 : vector<1x256xi1>, vector<1x256xi32>
    %cst_26 = arith.constant 0.000000e+00 : f32
    %60 = vector.broadcast %cst_26 : f32 to vector<1x256xf32>
    %cst_27 = arith.constant 0.000000e+00 : f32
    %61 = vector.broadcast %cst_27 : f32 to vector<1x256xf32>
    %c0_28 = arith.constant 0 : index
    %c0_29 = arith.constant 0 : index
    %62 = memref.load %arg4[%c0_28, %c0_29] : memref<2x49xf32, #tpu.memory_space<smem>>
    %63 = vector.extract_strided_slice %42 {offsets = [0, 77], sizes = [1, 256], strides = [1, 1]} : vector<2x512xf32> to vector<1x256xf32>
    %64 = vector.broadcast %62 : f32 to vector<1x256xf32>
    %65 = arith.mulf %64, %63 : vector<1x256xf32>
    %66 = arith.addf %61, %65 : vector<1x256xf32>
    %c1_30 = arith.constant 1 : index
    %c0_31 = arith.constant 0 : index
    %67 = memref.load %arg4[%c1_30, %c0_31] : memref<2x49xf32, #tpu.memory_space<smem>>
    %68 = vector.extract_strided_slice %42 {offsets = [1, 77], sizes = [1, 256], strides = [1, 1]} : vector<2x512xf32> to vector<1x256xf32>
    %69 = vector.broadcast %67 : f32 to vector<1x256xf32>
    %70 = arith.mulf %69, %68 : vector<1x256xf32>
    %71 = arith.addf %66, %70 : vector<1x256xf32>
    %c0_32 = arith.constant 0 : index
    %c7 = arith.constant 7 : index
    %72 = memref.load %arg4[%c0_32, %c7] : memref<2x49xf32, #tpu.memory_space<smem>>
    %73 = vector.extract_strided_slice %42 {offsets = [0, 93], sizes = [1, 256], strides = [1, 1]} : vector<2x512xf32> to vector<1x256xf32>
    %74 = vector.broadcast %72 : f32 to vector<1x256xf32>
    %75 = arith.mulf %74, %73 : vector<1x256xf32>
    %76 = arith.addf %71, %75 : vector<1x256xf32>
    %c1_33 = arith.constant 1 : index
    %c7_34 = arith.constant 7 : index
    %77 = memref.load %arg4[%c1_33, %c7_34] : memref<2x49xf32, #tpu.memory_space<smem>>
    %78 = vector.extract_strided_slice %42 {offsets = [1, 93], sizes = [1, 256], strides = [1, 1]} : vector<2x512xf32> to vector<1x256xf32>
    %79 = vector.broadcast %77 : f32 to vector<1x256xf32>
    %80 = arith.mulf %79, %78 : vector<1x256xf32>
    %81 = arith.addf %76, %80 : vector<1x256xf32>
    %c0_35 = arith.constant 0 : index
    %c14 = arith.constant 14 : index
    %82 = memref.load %arg4[%c0_35, %c14] : memref<2x49xf32, #tpu.memory_space<smem>>
    %83 = vector.extract_strided_slice %42 {offsets = [0, 109], sizes = [1, 256], strides = [1, 1]} : vector<2x512xf32> to vector<1x256xf32>
    %84 = vector.broadcast %82 : f32 to vector<1x256xf32>
    %85 = arith.mulf %84, %83 : vector<1x256xf32>
    %86 = arith.addf %81, %85 : vector<1x256xf32>
    %c1_36 = arith.constant 1 : index
    %c14_37 = arith.constant 14 : index
    %87 = memref.load %arg4[%c1_36, %c14_37] : memref<2x49xf32, #tpu.memory_space<smem>>
    %88 = vector.extract_strided_slice %42 {offsets = [1, 109], sizes = [1, 256], strides = [1, 1]} : vector<2x512xf32> to vector<1x256xf32>
    %89 = vector.broadcast %87 : f32 to vector<1x256xf32>
    %90 = arith.mulf %89, %88 : vector<1x256xf32>
    %91 = arith.addf %86, %90 : vector<1x256xf32>
    %c0_38 = arith.constant 0 : index
    %c21 = arith.constant 21 : index
    %92 = memref.load %arg4[%c0_38, %c21] : memref<2x49xf32, #tpu.memory_space<smem>>
    %93 = vector.extract_strided_slice %42 {offsets = [0, 125], sizes = [1, 256], strides = [1, 1]} : vector<2x512xf32> to vector<1x256xf32>
    %94 = vector.broadcast %92 : f32 to vector<1x256xf32>
    %95 = arith.mulf %94, %93 : vector<1x256xf32>
    %96 = arith.addf %91, %95 : vector<1x256xf32>
    %c1_39 = arith.constant 1 : index
    %c21_40 = arith.constant 21 : index
    %97 = memref.load %arg4[%c1_39, %c21_40] : memref<2x49xf32, #tpu.memory_space<smem>>
    %98 = vector.extract_strided_slice %42 {offsets = [1, 125], sizes = [1, 256], strides = [1, 1]} : vector<2x512xf32> to vector<1x256xf32>
    %99 = vector.broadcast %97 : f32 to vector<1x256xf32>
    %100 = arith.mulf %99, %98 : vector<1x256xf32>
    %101 = arith.addf %96, %100 : vector<1x256xf32>
    %c0_41 = arith.constant 0 : index
    %c28 = arith.constant 28 : index
    %102 = memref.load %arg4[%c0_41, %c28] : memref<2x49xf32, #tpu.memory_space<smem>>
    %103 = vector.extract_strided_slice %42 {offsets = [0, 141], sizes = [1, 256], strides = [1, 1]} : vector<2x512xf32> to vector<1x256xf32>
    %104 = vector.broadcast %102 : f32 to vector<1x256xf32>
    %105 = arith.mulf %104, %103 : vector<1x256xf32>
    %106 = arith.addf %101, %105 : vector<1x256xf32>
    %c1_42 = arith.constant 1 : index
    %c28_43 = arith.constant 28 : index
    %107 = memref.load %arg4[%c1_42, %c28_43] : memref<2x49xf32, #tpu.memory_space<smem>>
    %108 = vector.extract_strided_slice %42 {offsets = [1, 141], sizes = [1, 256], strides = [1, 1]} : vector<2x512xf32> to vector<1x256xf32>
    %109 = vector.broadcast %107 : f32 to vector<1x256xf32>
    %110 = arith.mulf %109, %108 : vector<1x256xf32>
    %111 = arith.addf %106, %110 : vector<1x256xf32>
    %c0_44 = arith.constant 0 : index
    %c35 = arith.constant 35 : index
    %112 = memref.load %arg4[%c0_44, %c35] : memref<2x49xf32, #tpu.memory_space<smem>>
    %113 = vector.extract_strided_slice %42 {offsets = [0, 157], sizes = [1, 256], strides = [1, 1]} : vector<2x512xf32> to vector<1x256xf32>
    %114 = vector.broadcast %112 : f32 to vector<1x256xf32>
    %115 = arith.mulf %114, %113 : vector<1x256xf32>
    %116 = arith.addf %111, %115 : vector<1x256xf32>
    %c1_45 = arith.constant 1 : index
    %c35_46 = arith.constant 35 : index
    %117 = memref.load %arg4[%c1_45, %c35_46] : memref<2x49xf32, #tpu.memory_space<smem>>
    %118 = vector.extract_strided_slice %42 {offsets = [1, 157], sizes = [1, 256], strides = [1, 1]} : vector<2x512xf32> to vector<1x256xf32>
    %119 = vector.broadcast %117 : f32 to vector<1x256xf32>
    %120 = arith.mulf %119, %118 : vector<1x256xf32>
    %121 = arith.addf %116, %120 : vector<1x256xf32>
    %c0_47 = arith.constant 0 : index
    %c42 = arith.constant 42 : index
    %122 = memref.load %arg4[%c0_47, %c42] : memref<2x49xf32, #tpu.memory_space<smem>>
    %123 = vector.extract_strided_slice %42 {offsets = [0, 173], sizes = [1, 256], strides = [1, 1]} : vector<2x512xf32> to vector<1x256xf32>
    %124 = vector.broadcast %122 : f32 to vector<1x256xf32>
    %125 = arith.mulf %124, %123 : vector<1x256xf32>
    %126 = arith.addf %121, %125 : vector<1x256xf32>
    %c1_48 = arith.constant 1 : index
    %c42_49 = arith.constant 42 : index
    %127 = memref.load %arg4[%c1_48, %c42_49] : memref<2x49xf32, #tpu.memory_space<smem>>
    %128 = vector.extract_strided_slice %42 {offsets = [1, 173], sizes = [1, 256], strides = [1, 1]} : vector<2x512xf32> to vector<1x256xf32>
    %129 = vector.broadcast %127 : f32 to vector<1x256xf32>
    %130 = arith.mulf %129, %128 : vector<1x256xf32>
    %131 = arith.addf %126, %130 : vector<1x256xf32>
    %c3_i32 = arith.constant 3 : i32
    %132 = vector.broadcast %c3_i32 : i32 to vector<1x256xi32>
    %133 = arith.cmpi sge, %59, %132 : vector<1x256xi32>
    %c19_i32 = arith.constant 19 : i32
    %134 = vector.broadcast %c19_i32 : i32 to vector<1x256xi32>
    %135 = arith.cmpi slt, %59, %134 : vector<1x256xi32>
    %136 = arith.andi %133, %135 : vector<1x256xi1>
    %cst_50 = arith.constant 0.000000e+00 : f32
    %137 = vector.broadcast %cst_50 : f32 to vector<1x256xf32>
    %138 = arith.select %136, %131, %137 : vector<1x256xi1>, vector<1x256xf32>
    %139 = arith.addf %60, %138 : vector<1x256xf32>
    %cst_51 = arith.constant 0.000000e+00 : f32
    %140 = vector.broadcast %cst_51 : f32 to vector<1x256xf32>
    %c0_52 = arith.constant 0 : index
    %c1_53 = arith.constant 1 : index
    %141 = memref.load %arg4[%c0_52, %c1_53] : memref<2x49xf32, #tpu.memory_space<smem>>
    %142 = vector.extract_strided_slice %42 {offsets = [0, 78], sizes = [1, 256], strides = [1, 1]} : vector<2x512xf32> to vector<1x256xf32>
    %143 = vector.broadcast %141 : f32 to vector<1x256xf32>
    %144 = arith.mulf %143, %142 : vector<1x256xf32>
    %145 = arith.addf %140, %144 : vector<1x256xf32>
    %c1_54 = arith.constant 1 : index
    %c1_55 = arith.constant 1 : index
    %146 = memref.load %arg4[%c1_54, %c1_55] : memref<2x49xf32, #tpu.memory_space<smem>>
    %147 = vector.extract_strided_slice %42 {offsets = [1, 78], sizes = [1, 256], strides = [1, 1]} : vector<2x512xf32> to vector<1x256xf32>
    %148 = vector.broadcast %146 : f32 to vector<1x256xf32>
    %149 = arith.mulf %148, %147 : vector<1x256xf32>
    %150 = arith.addf %145, %149 : vector<1x256xf32>
    %c0_56 = arith.constant 0 : index
    %c8 = arith.constant 8 : index
    %151 = memref.load %arg4[%c0_56, %c8] : memref<2x49xf32, #tpu.memory_space<smem>>
    %152 = vector.extract_strided_slice %42 {offsets = [0, 94], sizes = [1, 256], strides = [1, 1]} : vector<2x512xf32> to vector<1x256xf32>
    %153 = vector.broadcast %151 : f32 to vector<1x256xf32>
    %154 = arith.mulf %153, %152 : vector<1x256xf32>
    %155 = arith.addf %150, %154 : vector<1x256xf32>
    %c1_57 = arith.constant 1 : index
    %c8_58 = arith.constant 8 : index
    %156 = memref.load %arg4[%c1_57, %c8_58] : memref<2x49xf32, #tpu.memory_space<smem>>
    %157 = vector.extract_strided_slice %42 {offsets = [1, 94], sizes = [1, 256], strides = [1, 1]} : vector<2x512xf32> to vector<1x256xf32>
    %158 = vector.broadcast %156 : f32 to vector<1x256xf32>
    %159 = arith.mulf %158, %157 : vector<1x256xf32>
    %160 = arith.addf %155, %159 : vector<1x256xf32>
    %c0_59 = arith.constant 0 : index
    %c15 = arith.constant 15 : index
    %161 = memref.load %arg4[%c0_59, %c15] : memref<2x49xf32, #tpu.memory_space<smem>>
    %162 = vector.extract_strided_slice %42 {offsets = [0, 110], sizes = [1, 256], strides = [1, 1]} : vector<2x512xf32> to vector<1x256xf32>
    %163 = vector.broadcast %161 : f32 to vector<1x256xf32>
    %164 = arith.mulf %163, %162 : vector<1x256xf32>
    %165 = arith.addf %160, %164 : vector<1x256xf32>
    %c1_60 = arith.constant 1 : index
    %c15_61 = arith.constant 15 : index
    %166 = memref.load %arg4[%c1_60, %c15_61] : memref<2x49xf32, #tpu.memory_space<smem>>
    %167 = vector.extract_strided_slice %42 {offsets = [1, 110], sizes = [1, 256], strides = [1, 1]} : vector<2x512xf32> to vector<1x256xf32>
    %168 = vector.broadcast %166 : f32 to vector<1x256xf32>
    %169 = arith.mulf %168, %167 : vector<1x256xf32>
    %170 = arith.addf %165, %169 : vector<1x256xf32>
    %c0_62 = arith.constant 0 : index
    %c22 = arith.constant 22 : index
    %171 = memref.load %arg4[%c0_62, %c22] : memref<2x49xf32, #tpu.memory_space<smem>>
    %172 = vector.extract_strided_slice %42 {offsets = [0, 126], sizes = [1, 256], strides = [1, 1]} : vector<2x512xf32> to vector<1x256xf32>
    %173 = vector.broadcast %171 : f32 to vector<1x256xf32>
    %174 = arith.mulf %173, %172 : vector<1x256xf32>
    %175 = arith.addf %170, %174 : vector<1x256xf32>
    %c1_63 = arith.constant 1 : index
    %c22_64 = arith.constant 22 : index
    %176 = memref.load %arg4[%c1_63, %c22_64] : memref<2x49xf32, #tpu.memory_space<smem>>
    %177 = vector.extract_strided_slice %42 {offsets = [1, 126], sizes = [1, 256], strides = [1, 1]} : vector<2x512xf32> to vector<1x256xf32>
    %178 = vector.broadcast %176 : f32 to vector<1x256xf32>
    %179 = arith.mulf %178, %177 : vector<1x256xf32>
    %180 = arith.addf %175, %179 : vector<1x256xf32>
    %c0_65 = arith.constant 0 : index
    %c29 = arith.constant 29 : index
    %181 = memref.load %arg4[%c0_65, %c29] : memref<2x49xf32, #tpu.memory_space<smem>>
    %182 = vector.extract_strided_slice %42 {offsets = [0, 142], sizes = [1, 256], strides = [1, 1]} : vector<2x512xf32> to vector<1x256xf32>
    %183 = vector.broadcast %181 : f32 to vector<1x256xf32>
    %184 = arith.mulf %183, %182 : vector<1x256xf32>
    %185 = arith.addf %180, %184 : vector<1x256xf32>
    %c1_66 = arith.constant 1 : index
    %c29_67 = arith.constant 29 : index
    %186 = memref.load %arg4[%c1_66, %c29_67] : memref<2x49xf32, #tpu.memory_space<smem>>
    %187 = vector.extract_strided_slice %42 {offsets = [1, 142], sizes = [1, 256], strides = [1, 1]} : vector<2x512xf32> to vector<1x256xf32>
    %188 = vector.broadcast %186 : f32 to vector<1x256xf32>
    %189 = arith.mulf %188, %187 : vector<1x256xf32>
    %190 = arith.addf %185, %189 : vector<1x256xf32>
    %c0_68 = arith.constant 0 : index
    %c36 = arith.constant 36 : index
    %191 = memref.load %arg4[%c0_68, %c36] : memref<2x49xf32, #tpu.memory_space<smem>>
    %192 = vector.extract_strided_slice %42 {offsets = [0, 158], sizes = [1, 256], strides = [1, 1]} : vector<2x512xf32> to vector<1x256xf32>
    %193 = vector.broadcast %191 : f32 to vector<1x256xf32>
    %194 = arith.mulf %193, %192 : vector<1x256xf32>
    %195 = arith.addf %190, %194 : vector<1x256xf32>
    %c1_69 = arith.constant 1 : index
    %c36_70 = arith.constant 36 : index
    %196 = memref.load %arg4[%c1_69, %c36_70] : memref<2x49xf32, #tpu.memory_space<smem>>
    %197 = vector.extract_strided_slice %42 {offsets = [1, 158], sizes = [1, 256], strides = [1, 1]} : vector<2x512xf32> to vector<1x256xf32>
    %198 = vector.broadcast %196 : f32 to vector<1x256xf32>
    %199 = arith.mulf %198, %197 : vector<1x256xf32>
    %200 = arith.addf %195, %199 : vector<1x256xf32>
    %c0_71 = arith.constant 0 : index
    %c43 = arith.constant 43 : index
    %201 = memref.load %arg4[%c0_71, %c43] : memref<2x49xf32, #tpu.memory_space<smem>>
    %202 = vector.extract_strided_slice %42 {offsets = [0, 174], sizes = [1, 256], strides = [1, 1]} : vector<2x512xf32> to vector<1x256xf32>
    %203 = vector.broadcast %201 : f32 to vector<1x256xf32>
    %204 = arith.mulf %203, %202 : vector<1x256xf32>
    %205 = arith.addf %200, %204 : vector<1x256xf32>
    %c1_72 = arith.constant 1 : index
    %c43_73 = arith.constant 43 : index
    %206 = memref.load %arg4[%c1_72, %c43_73] : memref<2x49xf32, #tpu.memory_space<smem>>
    %207 = vector.extract_strided_slice %42 {offsets = [1, 174], sizes = [1, 256], strides = [1, 1]} : vector<2x512xf32> to vector<1x256xf32>
    %208 = vector.broadcast %206 : f32 to vector<1x256xf32>
    %209 = arith.mulf %208, %207 : vector<1x256xf32>
    %210 = arith.addf %205, %209 : vector<1x256xf32>
    %c2_i32 = arith.constant 2 : i32
    %211 = vector.broadcast %c2_i32 : i32 to vector<1x256xi32>
    %212 = arith.cmpi sge, %59, %211 : vector<1x256xi32>
    %c18_i32 = arith.constant 18 : i32
    %213 = vector.broadcast %c18_i32 : i32 to vector<1x256xi32>
    %214 = arith.cmpi slt, %59, %213 : vector<1x256xi32>
    %215 = arith.andi %212, %214 : vector<1x256xi1>
    %cst_74 = arith.constant 0.000000e+00 : f32
    %216 = vector.broadcast %cst_74 : f32 to vector<1x256xf32>
    %217 = arith.select %215, %210, %216 : vector<1x256xi1>, vector<1x256xf32>
    %218 = arith.addf %139, %217 : vector<1x256xf32>
    %cst_75 = arith.constant 0.000000e+00 : f32
    %219 = vector.broadcast %cst_75 : f32 to vector<1x256xf32>
    %c0_76 = arith.constant 0 : index
    %c2 = arith.constant 2 : index
    %220 = memref.load %arg4[%c0_76, %c2] : memref<2x49xf32, #tpu.memory_space<smem>>
    %221 = vector.extract_strided_slice %42 {offsets = [0, 79], sizes = [1, 256], strides = [1, 1]} : vector<2x512xf32> to vector<1x256xf32>
    %222 = vector.broadcast %220 : f32 to vector<1x256xf32>
    %223 = arith.mulf %222, %221 : vector<1x256xf32>
    %224 = arith.addf %219, %223 : vector<1x256xf32>
    %c1_77 = arith.constant 1 : index
    %c2_78 = arith.constant 2 : index
    %225 = memref.load %arg4[%c1_77, %c2_78] : memref<2x49xf32, #tpu.memory_space<smem>>
    %226 = vector.extract_strided_slice %42 {offsets = [1, 79], sizes = [1, 256], strides = [1, 1]} : vector<2x512xf32> to vector<1x256xf32>
    %227 = vector.broadcast %225 : f32 to vector<1x256xf32>
    %228 = arith.mulf %227, %226 : vector<1x256xf32>
    %229 = arith.addf %224, %228 : vector<1x256xf32>
    %c0_79 = arith.constant 0 : index
    %c9 = arith.constant 9 : index
    %230 = memref.load %arg4[%c0_79, %c9] : memref<2x49xf32, #tpu.memory_space<smem>>
    %231 = vector.extract_strided_slice %42 {offsets = [0, 95], sizes = [1, 256], strides = [1, 1]} : vector<2x512xf32> to vector<1x256xf32>
    %232 = vector.broadcast %230 : f32 to vector<1x256xf32>
    %233 = arith.mulf %232, %231 : vector<1x256xf32>
    %234 = arith.addf %229, %233 : vector<1x256xf32>
    %c1_80 = arith.constant 1 : index
    %c9_81 = arith.constant 9 : index
    %235 = memref.load %arg4[%c1_80, %c9_81] : memref<2x49xf32, #tpu.memory_space<smem>>
    %236 = vector.extract_strided_slice %42 {offsets = [1, 95], sizes = [1, 256], strides = [1, 1]} : vector<2x512xf32> to vector<1x256xf32>
    %237 = vector.broadcast %235 : f32 to vector<1x256xf32>
    %238 = arith.mulf %237, %236 : vector<1x256xf32>
    %239 = arith.addf %234, %238 : vector<1x256xf32>
    %c0_82 = arith.constant 0 : index
    %c16 = arith.constant 16 : index
    %240 = memref.load %arg4[%c0_82, %c16] : memref<2x49xf32, #tpu.memory_space<smem>>
    %241 = vector.extract_strided_slice %42 {offsets = [0, 111], sizes = [1, 256], strides = [1, 1]} : vector<2x512xf32> to vector<1x256xf32>
    %242 = vector.broadcast %240 : f32 to vector<1x256xf32>
    %243 = arith.mulf %242, %241 : vector<1x256xf32>
    %244 = arith.addf %239, %243 : vector<1x256xf32>
    %c1_83 = arith.constant 1 : index
    %c16_84 = arith.constant 16 : index
    %245 = memref.load %arg4[%c1_83, %c16_84] : memref<2x49xf32, #tpu.memory_space<smem>>
    %246 = vector.extract_strided_slice %42 {offsets = [1, 111], sizes = [1, 256], strides = [1, 1]} : vector<2x512xf32> to vector<1x256xf32>
    %247 = vector.broadcast %245 : f32 to vector<1x256xf32>
    %248 = arith.mulf %247, %246 : vector<1x256xf32>
    %249 = arith.addf %244, %248 : vector<1x256xf32>
    %c0_85 = arith.constant 0 : index
    %c23 = arith.constant 23 : index
    %250 = memref.load %arg4[%c0_85, %c23] : memref<2x49xf32, #tpu.memory_space<smem>>
    %251 = vector.extract_strided_slice %42 {offsets = [0, 127], sizes = [1, 256], strides = [1, 1]} : vector<2x512xf32> to vector<1x256xf32>
    %252 = vector.broadcast %250 : f32 to vector<1x256xf32>
    %253 = arith.mulf %252, %251 : vector<1x256xf32>
    %254 = arith.addf %249, %253 : vector<1x256xf32>
    %c1_86 = arith.constant 1 : index
    %c23_87 = arith.constant 23 : index
    %255 = memref.load %arg4[%c1_86, %c23_87] : memref<2x49xf32, #tpu.memory_space<smem>>
    %256 = vector.extract_strided_slice %42 {offsets = [1, 127], sizes = [1, 256], strides = [1, 1]} : vector<2x512xf32> to vector<1x256xf32>
    %257 = vector.broadcast %255 : f32 to vector<1x256xf32>
    %258 = arith.mulf %257, %256 : vector<1x256xf32>
    %259 = arith.addf %254, %258 : vector<1x256xf32>
    %c0_88 = arith.constant 0 : index
    %c30 = arith.constant 30 : index
    %260 = memref.load %arg4[%c0_88, %c30] : memref<2x49xf32, #tpu.memory_space<smem>>
    %261 = vector.extract_strided_slice %42 {offsets = [0, 143], sizes = [1, 256], strides = [1, 1]} : vector<2x512xf32> to vector<1x256xf32>
    %262 = vector.broadcast %260 : f32 to vector<1x256xf32>
    %263 = arith.mulf %262, %261 : vector<1x256xf32>
    %264 = arith.addf %259, %263 : vector<1x256xf32>
    %c1_89 = arith.constant 1 : index
    %c30_90 = arith.constant 30 : index
    %265 = memref.load %arg4[%c1_89, %c30_90] : memref<2x49xf32, #tpu.memory_space<smem>>
    %266 = vector.extract_strided_slice %42 {offsets = [1, 143], sizes = [1, 256], strides = [1, 1]} : vector<2x512xf32> to vector<1x256xf32>
    %267 = vector.broadcast %265 : f32 to vector<1x256xf32>
    %268 = arith.mulf %267, %266 : vector<1x256xf32>
    %269 = arith.addf %264, %268 : vector<1x256xf32>
    %c0_91 = arith.constant 0 : index
    %c37 = arith.constant 37 : index
    %270 = memref.load %arg4[%c0_91, %c37] : memref<2x49xf32, #tpu.memory_space<smem>>
    %271 = vector.extract_strided_slice %42 {offsets = [0, 159], sizes = [1, 256], strides = [1, 1]} : vector<2x512xf32> to vector<1x256xf32>
    %272 = vector.broadcast %270 : f32 to vector<1x256xf32>
    %273 = arith.mulf %272, %271 : vector<1x256xf32>
    %274 = arith.addf %269, %273 : vector<1x256xf32>
    %c1_92 = arith.constant 1 : index
    %c37_93 = arith.constant 37 : index
    %275 = memref.load %arg4[%c1_92, %c37_93] : memref<2x49xf32, #tpu.memory_space<smem>>
    %276 = vector.extract_strided_slice %42 {offsets = [1, 159], sizes = [1, 256], strides = [1, 1]} : vector<2x512xf32> to vector<1x256xf32>
    %277 = vector.broadcast %275 : f32 to vector<1x256xf32>
    %278 = arith.mulf %277, %276 : vector<1x256xf32>
    %279 = arith.addf %274, %278 : vector<1x256xf32>
    %c0_94 = arith.constant 0 : index
    %c44 = arith.constant 44 : index
    %280 = memref.load %arg4[%c0_94, %c44] : memref<2x49xf32, #tpu.memory_space<smem>>
    %281 = vector.extract_strided_slice %42 {offsets = [0, 175], sizes = [1, 256], strides = [1, 1]} : vector<2x512xf32> to vector<1x256xf32>
    %282 = vector.broadcast %280 : f32 to vector<1x256xf32>
    %283 = arith.mulf %282, %281 : vector<1x256xf32>
    %284 = arith.addf %279, %283 : vector<1x256xf32>
    %c1_95 = arith.constant 1 : index
    %c44_96 = arith.constant 44 : index
    %285 = memref.load %arg4[%c1_95, %c44_96] : memref<2x49xf32, #tpu.memory_space<smem>>
    %286 = vector.extract_strided_slice %42 {offsets = [1, 175], sizes = [1, 256], strides = [1, 1]} : vector<2x512xf32> to vector<1x256xf32>
    %287 = vector.broadcast %285 : f32 to vector<1x256xf32>
    %288 = arith.mulf %287, %286 : vector<1x256xf32>
    %289 = arith.addf %284, %288 : vector<1x256xf32>
    %c1_i32_97 = arith.constant 1 : i32
    %290 = vector.broadcast %c1_i32_97 : i32 to vector<1x256xi32>
    %291 = arith.cmpi sge, %59, %290 : vector<1x256xi32>
    %c17_i32 = arith.constant 17 : i32
    %292 = vector.broadcast %c17_i32 : i32 to vector<1x256xi32>
    %293 = arith.cmpi slt, %59, %292 : vector<1x256xi32>
    %294 = arith.andi %291, %293 : vector<1x256xi1>
    %cst_98 = arith.constant 0.000000e+00 : f32
    %295 = vector.broadcast %cst_98 : f32 to vector<1x256xf32>
    %296 = arith.select %294, %289, %295 : vector<1x256xi1>, vector<1x256xf32>
    %297 = arith.addf %218, %296 : vector<1x256xf32>
    %cst_99 = arith.constant 0.000000e+00 : f32
    %298 = vector.broadcast %cst_99 : f32 to vector<1x256xf32>
    %c0_100 = arith.constant 0 : index
    %c3 = arith.constant 3 : index
    %299 = memref.load %arg4[%c0_100, %c3] : memref<2x49xf32, #tpu.memory_space<smem>>
    %300 = vector.extract_strided_slice %42 {offsets = [0, 80], sizes = [1, 256], strides = [1, 1]} : vector<2x512xf32> to vector<1x256xf32>
    %301 = vector.broadcast %299 : f32 to vector<1x256xf32>
    %302 = arith.mulf %301, %300 : vector<1x256xf32>
    %303 = arith.addf %298, %302 : vector<1x256xf32>
    %c1_101 = arith.constant 1 : index
    %c3_102 = arith.constant 3 : index
    %304 = memref.load %arg4[%c1_101, %c3_102] : memref<2x49xf32, #tpu.memory_space<smem>>
    %305 = vector.extract_strided_slice %42 {offsets = [1, 80], sizes = [1, 256], strides = [1, 1]} : vector<2x512xf32> to vector<1x256xf32>
    %306 = vector.broadcast %304 : f32 to vector<1x256xf32>
    %307 = arith.mulf %306, %305 : vector<1x256xf32>
    %308 = arith.addf %303, %307 : vector<1x256xf32>
    %c0_103 = arith.constant 0 : index
    %c10 = arith.constant 10 : index
    %309 = memref.load %arg4[%c0_103, %c10] : memref<2x49xf32, #tpu.memory_space<smem>>
    %310 = vector.extract_strided_slice %42 {offsets = [0, 96], sizes = [1, 256], strides = [1, 1]} : vector<2x512xf32> to vector<1x256xf32>
    %311 = vector.broadcast %309 : f32 to vector<1x256xf32>
    %312 = arith.mulf %311, %310 : vector<1x256xf32>
    %313 = arith.addf %308, %312 : vector<1x256xf32>
    %c1_104 = arith.constant 1 : index
    %c10_105 = arith.constant 10 : index
    %314 = memref.load %arg4[%c1_104, %c10_105] : memref<2x49xf32, #tpu.memory_space<smem>>
    %315 = vector.extract_strided_slice %42 {offsets = [1, 96], sizes = [1, 256], strides = [1, 1]} : vector<2x512xf32> to vector<1x256xf32>
    %316 = vector.broadcast %314 : f32 to vector<1x256xf32>
    %317 = arith.mulf %316, %315 : vector<1x256xf32>
    %318 = arith.addf %313, %317 : vector<1x256xf32>
    %c0_106 = arith.constant 0 : index
    %c17 = arith.constant 17 : index
    %319 = memref.load %arg4[%c0_106, %c17] : memref<2x49xf32, #tpu.memory_space<smem>>
    %320 = vector.extract_strided_slice %42 {offsets = [0, 112], sizes = [1, 256], strides = [1, 1]} : vector<2x512xf32> to vector<1x256xf32>
    %321 = vector.broadcast %319 : f32 to vector<1x256xf32>
    %322 = arith.mulf %321, %320 : vector<1x256xf32>
    %323 = arith.addf %318, %322 : vector<1x256xf32>
    %c1_107 = arith.constant 1 : index
    %c17_108 = arith.constant 17 : index
    %324 = memref.load %arg4[%c1_107, %c17_108] : memref<2x49xf32, #tpu.memory_space<smem>>
    %325 = vector.extract_strided_slice %42 {offsets = [1, 112], sizes = [1, 256], strides = [1, 1]} : vector<2x512xf32> to vector<1x256xf32>
    %326 = vector.broadcast %324 : f32 to vector<1x256xf32>
    %327 = arith.mulf %326, %325 : vector<1x256xf32>
    %328 = arith.addf %323, %327 : vector<1x256xf32>
    %c0_109 = arith.constant 0 : index
    %c24 = arith.constant 24 : index
    %329 = memref.load %arg4[%c0_109, %c24] : memref<2x49xf32, #tpu.memory_space<smem>>
    %330 = vector.extract_strided_slice %42 {offsets = [0, 128], sizes = [1, 256], strides = [1, 1]} : vector<2x512xf32> to vector<1x256xf32>
    %331 = vector.broadcast %329 : f32 to vector<1x256xf32>
    %332 = arith.mulf %331, %330 : vector<1x256xf32>
    %333 = arith.addf %328, %332 : vector<1x256xf32>
    %c1_110 = arith.constant 1 : index
    %c24_111 = arith.constant 24 : index
    %334 = memref.load %arg4[%c1_110, %c24_111] : memref<2x49xf32, #tpu.memory_space<smem>>
    %335 = vector.extract_strided_slice %42 {offsets = [1, 128], sizes = [1, 256], strides = [1, 1]} : vector<2x512xf32> to vector<1x256xf32>
    %336 = vector.broadcast %334 : f32 to vector<1x256xf32>
    %337 = arith.mulf %336, %335 : vector<1x256xf32>
    %338 = arith.addf %333, %337 : vector<1x256xf32>
    %c0_112 = arith.constant 0 : index
    %c31 = arith.constant 31 : index
    %339 = memref.load %arg4[%c0_112, %c31] : memref<2x49xf32, #tpu.memory_space<smem>>
    %340 = vector.extract_strided_slice %42 {offsets = [0, 144], sizes = [1, 256], strides = [1, 1]} : vector<2x512xf32> to vector<1x256xf32>
    %341 = vector.broadcast %339 : f32 to vector<1x256xf32>
    %342 = arith.mulf %341, %340 : vector<1x256xf32>
    %343 = arith.addf %338, %342 : vector<1x256xf32>
    %c1_113 = arith.constant 1 : index
    %c31_114 = arith.constant 31 : index
    %344 = memref.load %arg4[%c1_113, %c31_114] : memref<2x49xf32, #tpu.memory_space<smem>>
    %345 = vector.extract_strided_slice %42 {offsets = [1, 144], sizes = [1, 256], strides = [1, 1]} : vector<2x512xf32> to vector<1x256xf32>
    %346 = vector.broadcast %344 : f32 to vector<1x256xf32>
    %347 = arith.mulf %346, %345 : vector<1x256xf32>
    %348 = arith.addf %343, %347 : vector<1x256xf32>
    %c0_115 = arith.constant 0 : index
    %c38 = arith.constant 38 : index
    %349 = memref.load %arg4[%c0_115, %c38] : memref<2x49xf32, #tpu.memory_space<smem>>
    %350 = vector.extract_strided_slice %42 {offsets = [0, 160], sizes = [1, 256], strides = [1, 1]} : vector<2x512xf32> to vector<1x256xf32>
    %351 = vector.broadcast %349 : f32 to vector<1x256xf32>
    %352 = arith.mulf %351, %350 : vector<1x256xf32>
    %353 = arith.addf %348, %352 : vector<1x256xf32>
    %c1_116 = arith.constant 1 : index
    %c38_117 = arith.constant 38 : index
    %354 = memref.load %arg4[%c1_116, %c38_117] : memref<2x49xf32, #tpu.memory_space<smem>>
    %355 = vector.extract_strided_slice %42 {offsets = [1, 160], sizes = [1, 256], strides = [1, 1]} : vector<2x512xf32> to vector<1x256xf32>
    %356 = vector.broadcast %354 : f32 to vector<1x256xf32>
    %357 = arith.mulf %356, %355 : vector<1x256xf32>
    %358 = arith.addf %353, %357 : vector<1x256xf32>
    %c0_118 = arith.constant 0 : index
    %c45 = arith.constant 45 : index
    %359 = memref.load %arg4[%c0_118, %c45] : memref<2x49xf32, #tpu.memory_space<smem>>
    %360 = vector.extract_strided_slice %42 {offsets = [0, 176], sizes = [1, 256], strides = [1, 1]} : vector<2x512xf32> to vector<1x256xf32>
    %361 = vector.broadcast %359 : f32 to vector<1x256xf32>
    %362 = arith.mulf %361, %360 : vector<1x256xf32>
    %363 = arith.addf %358, %362 : vector<1x256xf32>
    %c1_119 = arith.constant 1 : index
    %c45_120 = arith.constant 45 : index
    %364 = memref.load %arg4[%c1_119, %c45_120] : memref<2x49xf32, #tpu.memory_space<smem>>
    %365 = vector.extract_strided_slice %42 {offsets = [1, 176], sizes = [1, 256], strides = [1, 1]} : vector<2x512xf32> to vector<1x256xf32>
    %366 = vector.broadcast %364 : f32 to vector<1x256xf32>
    %367 = arith.mulf %366, %365 : vector<1x256xf32>
    %368 = arith.addf %363, %367 : vector<1x256xf32>
    %c0_i32_121 = arith.constant 0 : i32
    %369 = vector.broadcast %c0_i32_121 : i32 to vector<1x256xi32>
    %370 = arith.cmpi sge, %59, %369 : vector<1x256xi32>
    %c16_i32_122 = arith.constant 16 : i32
    %371 = vector.broadcast %c16_i32_122 : i32 to vector<1x256xi32>
    %372 = arith.cmpi slt, %59, %371 : vector<1x256xi32>
    %373 = arith.andi %370, %372 : vector<1x256xi1>
    %cst_123 = arith.constant 0.000000e+00 : f32
    %374 = vector.broadcast %cst_123 : f32 to vector<1x256xf32>
    %375 = arith.select %373, %368, %374 : vector<1x256xi1>, vector<1x256xf32>
    %376 = arith.addf %297, %375 : vector<1x256xf32>
    %cst_124 = arith.constant 0.000000e+00 : f32
    %377 = vector.broadcast %cst_124 : f32 to vector<1x256xf32>
    %c0_125 = arith.constant 0 : index
    %c4 = arith.constant 4 : index
    %378 = memref.load %arg4[%c0_125, %c4] : memref<2x49xf32, #tpu.memory_space<smem>>
    %379 = vector.extract_strided_slice %42 {offsets = [0, 81], sizes = [1, 256], strides = [1, 1]} : vector<2x512xf32> to vector<1x256xf32>
    %380 = vector.broadcast %378 : f32 to vector<1x256xf32>
    %381 = arith.mulf %380, %379 : vector<1x256xf32>
    %382 = arith.addf %377, %381 : vector<1x256xf32>
    %c1_126 = arith.constant 1 : index
    %c4_127 = arith.constant 4 : index
    %383 = memref.load %arg4[%c1_126, %c4_127] : memref<2x49xf32, #tpu.memory_space<smem>>
    %384 = vector.extract_strided_slice %42 {offsets = [1, 81], sizes = [1, 256], strides = [1, 1]} : vector<2x512xf32> to vector<1x256xf32>
    %385 = vector.broadcast %383 : f32 to vector<1x256xf32>
    %386 = arith.mulf %385, %384 : vector<1x256xf32>
    %387 = arith.addf %382, %386 : vector<1x256xf32>
    %c0_128 = arith.constant 0 : index
    %c11 = arith.constant 11 : index
    %388 = memref.load %arg4[%c0_128, %c11] : memref<2x49xf32, #tpu.memory_space<smem>>
    %389 = vector.extract_strided_slice %42 {offsets = [0, 97], sizes = [1, 256], strides = [1, 1]} : vector<2x512xf32> to vector<1x256xf32>
    %390 = vector.broadcast %388 : f32 to vector<1x256xf32>
    %391 = arith.mulf %390, %389 : vector<1x256xf32>
    %392 = arith.addf %387, %391 : vector<1x256xf32>
    %c1_129 = arith.constant 1 : index
    %c11_130 = arith.constant 11 : index
    %393 = memref.load %arg4[%c1_129, %c11_130] : memref<2x49xf32, #tpu.memory_space<smem>>
    %394 = vector.extract_strided_slice %42 {offsets = [1, 97], sizes = [1, 256], strides = [1, 1]} : vector<2x512xf32> to vector<1x256xf32>
    %395 = vector.broadcast %393 : f32 to vector<1x256xf32>
    %396 = arith.mulf %395, %394 : vector<1x256xf32>
    %397 = arith.addf %392, %396 : vector<1x256xf32>
    %c0_131 = arith.constant 0 : index
    %c18 = arith.constant 18 : index
    %398 = memref.load %arg4[%c0_131, %c18] : memref<2x49xf32, #tpu.memory_space<smem>>
    %399 = vector.extract_strided_slice %42 {offsets = [0, 113], sizes = [1, 256], strides = [1, 1]} : vector<2x512xf32> to vector<1x256xf32>
    %400 = vector.broadcast %398 : f32 to vector<1x256xf32>
    %401 = arith.mulf %400, %399 : vector<1x256xf32>
    %402 = arith.addf %397, %401 : vector<1x256xf32>
    %c1_132 = arith.constant 1 : index
    %c18_133 = arith.constant 18 : index
    %403 = memref.load %arg4[%c1_132, %c18_133] : memref<2x49xf32, #tpu.memory_space<smem>>
    %404 = vector.extract_strided_slice %42 {offsets = [1, 113], sizes = [1, 256], strides = [1, 1]} : vector<2x512xf32> to vector<1x256xf32>
    %405 = vector.broadcast %403 : f32 to vector<1x256xf32>
    %406 = arith.mulf %405, %404 : vector<1x256xf32>
    %407 = arith.addf %402, %406 : vector<1x256xf32>
    %c0_134 = arith.constant 0 : index
    %c25 = arith.constant 25 : index
    %408 = memref.load %arg4[%c0_134, %c25] : memref<2x49xf32, #tpu.memory_space<smem>>
    %409 = vector.extract_strided_slice %42 {offsets = [0, 129], sizes = [1, 256], strides = [1, 1]} : vector<2x512xf32> to vector<1x256xf32>
    %410 = vector.broadcast %408 : f32 to vector<1x256xf32>
    %411 = arith.mulf %410, %409 : vector<1x256xf32>
    %412 = arith.addf %407, %411 : vector<1x256xf32>
    %c1_135 = arith.constant 1 : index
    %c25_136 = arith.constant 25 : index
    %413 = memref.load %arg4[%c1_135, %c25_136] : memref<2x49xf32, #tpu.memory_space<smem>>
    %414 = vector.extract_strided_slice %42 {offsets = [1, 129], sizes = [1, 256], strides = [1, 1]} : vector<2x512xf32> to vector<1x256xf32>
    %415 = vector.broadcast %413 : f32 to vector<1x256xf32>
    %416 = arith.mulf %415, %414 : vector<1x256xf32>
    %417 = arith.addf %412, %416 : vector<1x256xf32>
    %c0_137 = arith.constant 0 : index
    %c32 = arith.constant 32 : index
    %418 = memref.load %arg4[%c0_137, %c32] : memref<2x49xf32, #tpu.memory_space<smem>>
    %419 = vector.extract_strided_slice %42 {offsets = [0, 145], sizes = [1, 256], strides = [1, 1]} : vector<2x512xf32> to vector<1x256xf32>
    %420 = vector.broadcast %418 : f32 to vector<1x256xf32>
    %421 = arith.mulf %420, %419 : vector<1x256xf32>
    %422 = arith.addf %417, %421 : vector<1x256xf32>
    %c1_138 = arith.constant 1 : index
    %c32_139 = arith.constant 32 : index
    %423 = memref.load %arg4[%c1_138, %c32_139] : memref<2x49xf32, #tpu.memory_space<smem>>
    %424 = vector.extract_strided_slice %42 {offsets = [1, 145], sizes = [1, 256], strides = [1, 1]} : vector<2x512xf32> to vector<1x256xf32>
    %425 = vector.broadcast %423 : f32 to vector<1x256xf32>
    %426 = arith.mulf %425, %424 : vector<1x256xf32>
    %427 = arith.addf %422, %426 : vector<1x256xf32>
    %c0_140 = arith.constant 0 : index
    %c39 = arith.constant 39 : index
    %428 = memref.load %arg4[%c0_140, %c39] : memref<2x49xf32, #tpu.memory_space<smem>>
    %429 = vector.extract_strided_slice %42 {offsets = [0, 161], sizes = [1, 256], strides = [1, 1]} : vector<2x512xf32> to vector<1x256xf32>
    %430 = vector.broadcast %428 : f32 to vector<1x256xf32>
    %431 = arith.mulf %430, %429 : vector<1x256xf32>
    %432 = arith.addf %427, %431 : vector<1x256xf32>
    %c1_141 = arith.constant 1 : index
    %c39_142 = arith.constant 39 : index
    %433 = memref.load %arg4[%c1_141, %c39_142] : memref<2x49xf32, #tpu.memory_space<smem>>
    %434 = vector.extract_strided_slice %42 {offsets = [1, 161], sizes = [1, 256], strides = [1, 1]} : vector<2x512xf32> to vector<1x256xf32>
    %435 = vector.broadcast %433 : f32 to vector<1x256xf32>
    %436 = arith.mulf %435, %434 : vector<1x256xf32>
    %437 = arith.addf %432, %436 : vector<1x256xf32>
    %c0_143 = arith.constant 0 : index
    %c46 = arith.constant 46 : index
    %438 = memref.load %arg4[%c0_143, %c46] : memref<2x49xf32, #tpu.memory_space<smem>>
    %439 = vector.extract_strided_slice %42 {offsets = [0, 177], sizes = [1, 256], strides = [1, 1]} : vector<2x512xf32> to vector<1x256xf32>
    %440 = vector.broadcast %438 : f32 to vector<1x256xf32>
    %441 = arith.mulf %440, %439 : vector<1x256xf32>
    %442 = arith.addf %437, %441 : vector<1x256xf32>
    %c1_144 = arith.constant 1 : index
    %c46_145 = arith.constant 46 : index
    %443 = memref.load %arg4[%c1_144, %c46_145] : memref<2x49xf32, #tpu.memory_space<smem>>
    %444 = vector.extract_strided_slice %42 {offsets = [1, 177], sizes = [1, 256], strides = [1, 1]} : vector<2x512xf32> to vector<1x256xf32>
    %445 = vector.broadcast %443 : f32 to vector<1x256xf32>
    %446 = arith.mulf %445, %444 : vector<1x256xf32>
    %447 = arith.addf %442, %446 : vector<1x256xf32>
    %c-1_i32 = arith.constant -1 : i32
    %448 = vector.broadcast %c-1_i32 : i32 to vector<1x256xi32>
    %449 = arith.cmpi sge, %59, %448 : vector<1x256xi32>
    %c15_i32 = arith.constant 15 : i32
    %450 = vector.broadcast %c15_i32 : i32 to vector<1x256xi32>
    %451 = arith.cmpi slt, %59, %450 : vector<1x256xi32>
    %452 = arith.andi %449, %451 : vector<1x256xi1>
    %cst_146 = arith.constant 0.000000e+00 : f32
    %453 = vector.broadcast %cst_146 : f32 to vector<1x256xf32>
    %454 = arith.select %452, %447, %453 : vector<1x256xi1>, vector<1x256xf32>
    %455 = arith.addf %376, %454 : vector<1x256xf32>
    %cst_147 = arith.constant 0.000000e+00 : f32
    %456 = vector.broadcast %cst_147 : f32 to vector<1x256xf32>
    %c0_148 = arith.constant 0 : index
    %c5 = arith.constant 5 : index
    %457 = memref.load %arg4[%c0_148, %c5] : memref<2x49xf32, #tpu.memory_space<smem>>
    %458 = vector.extract_strided_slice %42 {offsets = [0, 82], sizes = [1, 256], strides = [1, 1]} : vector<2x512xf32> to vector<1x256xf32>
    %459 = vector.broadcast %457 : f32 to vector<1x256xf32>
    %460 = arith.mulf %459, %458 : vector<1x256xf32>
    %461 = arith.addf %456, %460 : vector<1x256xf32>
    %c1_149 = arith.constant 1 : index
    %c5_150 = arith.constant 5 : index
    %462 = memref.load %arg4[%c1_149, %c5_150] : memref<2x49xf32, #tpu.memory_space<smem>>
    %463 = vector.extract_strided_slice %42 {offsets = [1, 82], sizes = [1, 256], strides = [1, 1]} : vector<2x512xf32> to vector<1x256xf32>
    %464 = vector.broadcast %462 : f32 to vector<1x256xf32>
    %465 = arith.mulf %464, %463 : vector<1x256xf32>
    %466 = arith.addf %461, %465 : vector<1x256xf32>
    %c0_151 = arith.constant 0 : index
    %c12 = arith.constant 12 : index
    %467 = memref.load %arg4[%c0_151, %c12] : memref<2x49xf32, #tpu.memory_space<smem>>
    %468 = vector.extract_strided_slice %42 {offsets = [0, 98], sizes = [1, 256], strides = [1, 1]} : vector<2x512xf32> to vector<1x256xf32>
    %469 = vector.broadcast %467 : f32 to vector<1x256xf32>
    %470 = arith.mulf %469, %468 : vector<1x256xf32>
    %471 = arith.addf %466, %470 : vector<1x256xf32>
    %c1_152 = arith.constant 1 : index
    %c12_153 = arith.constant 12 : index
    %472 = memref.load %arg4[%c1_152, %c12_153] : memref<2x49xf32, #tpu.memory_space<smem>>
    %473 = vector.extract_strided_slice %42 {offsets = [1, 98], sizes = [1, 256], strides = [1, 1]} : vector<2x512xf32> to vector<1x256xf32>
    %474 = vector.broadcast %472 : f32 to vector<1x256xf32>
    %475 = arith.mulf %474, %473 : vector<1x256xf32>
    %476 = arith.addf %471, %475 : vector<1x256xf32>
    %c0_154 = arith.constant 0 : index
    %c19 = arith.constant 19 : index
    %477 = memref.load %arg4[%c0_154, %c19] : memref<2x49xf32, #tpu.memory_space<smem>>
    %478 = vector.extract_strided_slice %42 {offsets = [0, 114], sizes = [1, 256], strides = [1, 1]} : vector<2x512xf32> to vector<1x256xf32>
    %479 = vector.broadcast %477 : f32 to vector<1x256xf32>
    %480 = arith.mulf %479, %478 : vector<1x256xf32>
    %481 = arith.addf %476, %480 : vector<1x256xf32>
    %c1_155 = arith.constant 1 : index
    %c19_156 = arith.constant 19 : index
    %482 = memref.load %arg4[%c1_155, %c19_156] : memref<2x49xf32, #tpu.memory_space<smem>>
    %483 = vector.extract_strided_slice %42 {offsets = [1, 114], sizes = [1, 256], strides = [1, 1]} : vector<2x512xf32> to vector<1x256xf32>
    %484 = vector.broadcast %482 : f32 to vector<1x256xf32>
    %485 = arith.mulf %484, %483 : vector<1x256xf32>
    %486 = arith.addf %481, %485 : vector<1x256xf32>
    %c0_157 = arith.constant 0 : index
    %c26 = arith.constant 26 : index
    %487 = memref.load %arg4[%c0_157, %c26] : memref<2x49xf32, #tpu.memory_space<smem>>
    %488 = vector.extract_strided_slice %42 {offsets = [0, 130], sizes = [1, 256], strides = [1, 1]} : vector<2x512xf32> to vector<1x256xf32>
    %489 = vector.broadcast %487 : f32 to vector<1x256xf32>
    %490 = arith.mulf %489, %488 : vector<1x256xf32>
    %491 = arith.addf %486, %490 : vector<1x256xf32>
    %c1_158 = arith.constant 1 : index
    %c26_159 = arith.constant 26 : index
    %492 = memref.load %arg4[%c1_158, %c26_159] : memref<2x49xf32, #tpu.memory_space<smem>>
    %493 = vector.extract_strided_slice %42 {offsets = [1, 130], sizes = [1, 256], strides = [1, 1]} : vector<2x512xf32> to vector<1x256xf32>
    %494 = vector.broadcast %492 : f32 to vector<1x256xf32>
    %495 = arith.mulf %494, %493 : vector<1x256xf32>
    %496 = arith.addf %491, %495 : vector<1x256xf32>
    %c0_160 = arith.constant 0 : index
    %c33 = arith.constant 33 : index
    %497 = memref.load %arg4[%c0_160, %c33] : memref<2x49xf32, #tpu.memory_space<smem>>
    %498 = vector.extract_strided_slice %42 {offsets = [0, 146], sizes = [1, 256], strides = [1, 1]} : vector<2x512xf32> to vector<1x256xf32>
    %499 = vector.broadcast %497 : f32 to vector<1x256xf32>
    %500 = arith.mulf %499, %498 : vector<1x256xf32>
    %501 = arith.addf %496, %500 : vector<1x256xf32>
    %c1_161 = arith.constant 1 : index
    %c33_162 = arith.constant 33 : index
    %502 = memref.load %arg4[%c1_161, %c33_162] : memref<2x49xf32, #tpu.memory_space<smem>>
    %503 = vector.extract_strided_slice %42 {offsets = [1, 146], sizes = [1, 256], strides = [1, 1]} : vector<2x512xf32> to vector<1x256xf32>
    %504 = vector.broadcast %502 : f32 to vector<1x256xf32>
    %505 = arith.mulf %504, %503 : vector<1x256xf32>
    %506 = arith.addf %501, %505 : vector<1x256xf32>
    %c0_163 = arith.constant 0 : index
    %c40 = arith.constant 40 : index
    %507 = memref.load %arg4[%c0_163, %c40] : memref<2x49xf32, #tpu.memory_space<smem>>
    %508 = vector.extract_strided_slice %42 {offsets = [0, 162], sizes = [1, 256], strides = [1, 1]} : vector<2x512xf32> to vector<1x256xf32>
    %509 = vector.broadcast %507 : f32 to vector<1x256xf32>
    %510 = arith.mulf %509, %508 : vector<1x256xf32>
    %511 = arith.addf %506, %510 : vector<1x256xf32>
    %c1_164 = arith.constant 1 : index
    %c40_165 = arith.constant 40 : index
    %512 = memref.load %arg4[%c1_164, %c40_165] : memref<2x49xf32, #tpu.memory_space<smem>>
    %513 = vector.extract_strided_slice %42 {offsets = [1, 162], sizes = [1, 256], strides = [1, 1]} : vector<2x512xf32> to vector<1x256xf32>
    %514 = vector.broadcast %512 : f32 to vector<1x256xf32>
    %515 = arith.mulf %514, %513 : vector<1x256xf32>
    %516 = arith.addf %511, %515 : vector<1x256xf32>
    %c0_166 = arith.constant 0 : index
    %c47 = arith.constant 47 : index
    %517 = memref.load %arg4[%c0_166, %c47] : memref<2x49xf32, #tpu.memory_space<smem>>
    %518 = vector.extract_strided_slice %42 {offsets = [0, 178], sizes = [1, 256], strides = [1, 1]} : vector<2x512xf32> to vector<1x256xf32>
    %519 = vector.broadcast %517 : f32 to vector<1x256xf32>
    %520 = arith.mulf %519, %518 : vector<1x256xf32>
    %521 = arith.addf %516, %520 : vector<1x256xf32>
    %c1_167 = arith.constant 1 : index
    %c47_168 = arith.constant 47 : index
    %522 = memref.load %arg4[%c1_167, %c47_168] : memref<2x49xf32, #tpu.memory_space<smem>>
    %523 = vector.extract_strided_slice %42 {offsets = [1, 178], sizes = [1, 256], strides = [1, 1]} : vector<2x512xf32> to vector<1x256xf32>
    %524 = vector.broadcast %522 : f32 to vector<1x256xf32>
    %525 = arith.mulf %524, %523 : vector<1x256xf32>
    %526 = arith.addf %521, %525 : vector<1x256xf32>
    %c-2_i32 = arith.constant -2 : i32
    %527 = vector.broadcast %c-2_i32 : i32 to vector<1x256xi32>
    %528 = arith.cmpi sge, %59, %527 : vector<1x256xi32>
    %c14_i32 = arith.constant 14 : i32
    %529 = vector.broadcast %c14_i32 : i32 to vector<1x256xi32>
    %530 = arith.cmpi slt, %59, %529 : vector<1x256xi32>
    %531 = arith.andi %528, %530 : vector<1x256xi1>
    %cst_169 = arith.constant 0.000000e+00 : f32
    %532 = vector.broadcast %cst_169 : f32 to vector<1x256xf32>
    %533 = arith.select %531, %526, %532 : vector<1x256xi1>, vector<1x256xf32>
    %534 = arith.addf %455, %533 : vector<1x256xf32>
    %cst_170 = arith.constant 0.000000e+00 : f32
    %535 = vector.broadcast %cst_170 : f32 to vector<1x256xf32>
    %c0_171 = arith.constant 0 : index
    %c6 = arith.constant 6 : index
    %536 = memref.load %arg4[%c0_171, %c6] : memref<2x49xf32, #tpu.memory_space<smem>>
    %537 = vector.extract_strided_slice %42 {offsets = [0, 83], sizes = [1, 256], strides = [1, 1]} : vector<2x512xf32> to vector<1x256xf32>
    %538 = vector.broadcast %536 : f32 to vector<1x256xf32>
    %539 = arith.mulf %538, %537 : vector<1x256xf32>
    %540 = arith.addf %535, %539 : vector<1x256xf32>
    %c1_172 = arith.constant 1 : index
    %c6_173 = arith.constant 6 : index
    %541 = memref.load %arg4[%c1_172, %c6_173] : memref<2x49xf32, #tpu.memory_space<smem>>
    %542 = vector.extract_strided_slice %42 {offsets = [1, 83], sizes = [1, 256], strides = [1, 1]} : vector<2x512xf32> to vector<1x256xf32>
    %543 = vector.broadcast %541 : f32 to vector<1x256xf32>
    %544 = arith.mulf %543, %542 : vector<1x256xf32>
    %545 = arith.addf %540, %544 : vector<1x256xf32>
    %c0_174 = arith.constant 0 : index
    %c13 = arith.constant 13 : index
    %546 = memref.load %arg4[%c0_174, %c13] : memref<2x49xf32, #tpu.memory_space<smem>>
    %547 = vector.extract_strided_slice %42 {offsets = [0, 99], sizes = [1, 256], strides = [1, 1]} : vector<2x512xf32> to vector<1x256xf32>
    %548 = vector.broadcast %546 : f32 to vector<1x256xf32>
    %549 = arith.mulf %548, %547 : vector<1x256xf32>
    %550 = arith.addf %545, %549 : vector<1x256xf32>
    %c1_175 = arith.constant 1 : index
    %c13_176 = arith.constant 13 : index
    %551 = memref.load %arg4[%c1_175, %c13_176] : memref<2x49xf32, #tpu.memory_space<smem>>
    %552 = vector.extract_strided_slice %42 {offsets = [1, 99], sizes = [1, 256], strides = [1, 1]} : vector<2x512xf32> to vector<1x256xf32>
    %553 = vector.broadcast %551 : f32 to vector<1x256xf32>
    %554 = arith.mulf %553, %552 : vector<1x256xf32>
    %555 = arith.addf %550, %554 : vector<1x256xf32>
    %c0_177 = arith.constant 0 : index
    %c20 = arith.constant 20 : index
    %556 = memref.load %arg4[%c0_177, %c20] : memref<2x49xf32, #tpu.memory_space<smem>>
    %557 = vector.extract_strided_slice %42 {offsets = [0, 115], sizes = [1, 256], strides = [1, 1]} : vector<2x512xf32> to vector<1x256xf32>
    %558 = vector.broadcast %556 : f32 to vector<1x256xf32>
    %559 = arith.mulf %558, %557 : vector<1x256xf32>
    %560 = arith.addf %555, %559 : vector<1x256xf32>
    %c1_178 = arith.constant 1 : index
    %c20_179 = arith.constant 20 : index
    %561 = memref.load %arg4[%c1_178, %c20_179] : memref<2x49xf32, #tpu.memory_space<smem>>
    %562 = vector.extract_strided_slice %42 {offsets = [1, 115], sizes = [1, 256], strides = [1, 1]} : vector<2x512xf32> to vector<1x256xf32>
    %563 = vector.broadcast %561 : f32 to vector<1x256xf32>
    %564 = arith.mulf %563, %562 : vector<1x256xf32>
    %565 = arith.addf %560, %564 : vector<1x256xf32>
    %c0_180 = arith.constant 0 : index
    %c27 = arith.constant 27 : index
    %566 = memref.load %arg4[%c0_180, %c27] : memref<2x49xf32, #tpu.memory_space<smem>>
    %567 = vector.extract_strided_slice %42 {offsets = [0, 131], sizes = [1, 256], strides = [1, 1]} : vector<2x512xf32> to vector<1x256xf32>
    %568 = vector.broadcast %566 : f32 to vector<1x256xf32>
    %569 = arith.mulf %568, %567 : vector<1x256xf32>
    %570 = arith.addf %565, %569 : vector<1x256xf32>
    %c1_181 = arith.constant 1 : index
    %c27_182 = arith.constant 27 : index
    %571 = memref.load %arg4[%c1_181, %c27_182] : memref<2x49xf32, #tpu.memory_space<smem>>
    %572 = vector.extract_strided_slice %42 {offsets = [1, 131], sizes = [1, 256], strides = [1, 1]} : vector<2x512xf32> to vector<1x256xf32>
    %573 = vector.broadcast %571 : f32 to vector<1x256xf32>
    %574 = arith.mulf %573, %572 : vector<1x256xf32>
    %575 = arith.addf %570, %574 : vector<1x256xf32>
    %c0_183 = arith.constant 0 : index
    %c34 = arith.constant 34 : index
    %576 = memref.load %arg4[%c0_183, %c34] : memref<2x49xf32, #tpu.memory_space<smem>>
    %577 = vector.extract_strided_slice %42 {offsets = [0, 147], sizes = [1, 256], strides = [1, 1]} : vector<2x512xf32> to vector<1x256xf32>
    %578 = vector.broadcast %576 : f32 to vector<1x256xf32>
    %579 = arith.mulf %578, %577 : vector<1x256xf32>
    %580 = arith.addf %575, %579 : vector<1x256xf32>
    %c1_184 = arith.constant 1 : index
    %c34_185 = arith.constant 34 : index
    %581 = memref.load %arg4[%c1_184, %c34_185] : memref<2x49xf32, #tpu.memory_space<smem>>
    %582 = vector.extract_strided_slice %42 {offsets = [1, 147], sizes = [1, 256], strides = [1, 1]} : vector<2x512xf32> to vector<1x256xf32>
    %583 = vector.broadcast %581 : f32 to vector<1x256xf32>
    %584 = arith.mulf %583, %582 : vector<1x256xf32>
    %585 = arith.addf %580, %584 : vector<1x256xf32>
    %c0_186 = arith.constant 0 : index
    %c41 = arith.constant 41 : index
    %586 = memref.load %arg4[%c0_186, %c41] : memref<2x49xf32, #tpu.memory_space<smem>>
    %587 = vector.extract_strided_slice %42 {offsets = [0, 163], sizes = [1, 256], strides = [1, 1]} : vector<2x512xf32> to vector<1x256xf32>
    %588 = vector.broadcast %586 : f32 to vector<1x256xf32>
    %589 = arith.mulf %588, %587 : vector<1x256xf32>
    %590 = arith.addf %585, %589 : vector<1x256xf32>
    %c1_187 = arith.constant 1 : index
    %c41_188 = arith.constant 41 : index
    %591 = memref.load %arg4[%c1_187, %c41_188] : memref<2x49xf32, #tpu.memory_space<smem>>
    %592 = vector.extract_strided_slice %42 {offsets = [1, 163], sizes = [1, 256], strides = [1, 1]} : vector<2x512xf32> to vector<1x256xf32>
    %593 = vector.broadcast %591 : f32 to vector<1x256xf32>
    %594 = arith.mulf %593, %592 : vector<1x256xf32>
    %595 = arith.addf %590, %594 : vector<1x256xf32>
    %c0_189 = arith.constant 0 : index
    %c48 = arith.constant 48 : index
    %596 = memref.load %arg4[%c0_189, %c48] : memref<2x49xf32, #tpu.memory_space<smem>>
    %597 = vector.extract_strided_slice %42 {offsets = [0, 179], sizes = [1, 256], strides = [1, 1]} : vector<2x512xf32> to vector<1x256xf32>
    %598 = vector.broadcast %596 : f32 to vector<1x256xf32>
    %599 = arith.mulf %598, %597 : vector<1x256xf32>
    %600 = arith.addf %595, %599 : vector<1x256xf32>
    %c1_190 = arith.constant 1 : index
    %c48_191 = arith.constant 48 : index
    %601 = memref.load %arg4[%c1_190, %c48_191] : memref<2x49xf32, #tpu.memory_space<smem>>
    %602 = vector.extract_strided_slice %42 {offsets = [1, 179], sizes = [1, 256], strides = [1, 1]} : vector<2x512xf32> to vector<1x256xf32>
    %603 = vector.broadcast %601 : f32 to vector<1x256xf32>
    %604 = arith.mulf %603, %602 : vector<1x256xf32>
    %605 = arith.addf %600, %604 : vector<1x256xf32>
    %c-3_i32 = arith.constant -3 : i32
    %606 = vector.broadcast %c-3_i32 : i32 to vector<1x256xi32>
    %607 = arith.cmpi sge, %59, %606 : vector<1x256xi32>
    %c13_i32 = arith.constant 13 : i32
    %608 = vector.broadcast %c13_i32 : i32 to vector<1x256xi32>
    %609 = arith.cmpi slt, %59, %608 : vector<1x256xi32>
    %610 = arith.andi %607, %609 : vector<1x256xi1>
    %cst_192 = arith.constant 0.000000e+00 : f32
    %611 = vector.broadcast %cst_192 : f32 to vector<1x256xf32>
    %612 = arith.select %610, %605, %611 : vector<1x256xi1>, vector<1x256xf32>
    %613 = arith.addf %534, %612 : vector<1x256xf32>
    %614 = arith.negf %613 : vector<1x256xf32>
    %615 = math.exp %614 : vector<1x256xf32>
    %cst_193 = arith.constant 1.000000e+00 : f32
    %616 = vector.broadcast %cst_193 : f32 to vector<1x256xf32>
    %617 = arith.addf %616, %615 : vector<1x256xf32>
    %618 = arith.divf %616, %617 : vector<1x256xf32>
    %619 = vector.broadcast %618 : vector<1x256xf32> to vector<32x256xf32>
    %620 = arith.mulf %31, %619 : vector<32x256xf32>
    %c0_194 = arith.constant 0 : index
    %c0_195 = arith.constant 0 : index
    %c0_196 = arith.constant 0 : index
    %621 = vector.load %arg5[%c0_194, %c0_195, %c0_196] : memref<1x32x256xf32, #tpu.memory_space<vmem>>, vector<1x32x256xf32>
    %622 = vector.shape_cast %621 : vector<1x32x256xf32> to vector<32x256xf32>
    %623 = vector.shape_cast %620 : vector<32x256xf32> to vector<1x32x256xf32>
    tpu.vector_store %arg5[%c0_194, %c0_195, %c0_196], %623 {strides = array<i32>} : memref<1x32x256xf32, #tpu.memory_space<vmem>>, vector<1x32x256xf32>,
    return
  }
  func.func @transform_0(%arg0: i32) -> (i32, i32, i32) {
    %c0_i32 = arith.constant 0 : i32
    %c0_i32_0 = arith.constant 0 : i32
    %c0_i32_1 = arith.constant 0 : i32
    return %arg0, %c0_i32, %c0_i32_0 : i32, i32, i32
  }
  func.func @transform_1(%arg0: i32) -> (i32, i32) {
    %c0_i32 = arith.constant 0 : i32
    %c0_i32_0 = arith.constant 0 : i32
    %c0_i32_1 = arith.constant 0 : i32
    return %c0_i32, %c0_i32_0 : i32, i32
  }
  func.func @transform_2(%arg0: i32) -> (i32, i32) {
    %c0_i32 = arith.constant 0 : i32
    %c0_i32_0 = arith.constant 0 : i32
    %c0_i32_1 = arith.constant 0 : i32
    return %c0_i32, %c0_i32_0 : i32, i32
  }
  func.func @transform_3(%arg0: i32) -> (i32, i32) {
    %c0_i32 = arith.constant 0 : i32
    %c0_i32_0 = arith.constant 0 : i32
    %c0_i32_1 = arith.constant 0 : i32
    return %c0_i32, %c0_i32_0 : i32, i32
  }
  func.func @transform_4(%arg0: i32) -> (i32, i32, i32) {
    %c0_i32 = arith.constant 0 : i32
    %c0_i32_0 = arith.constant 0 : i32
    %c0_i32_1 = arith.constant 0 : i32
    return %arg0, %c0_i32, %c0_i32_0 : i32, i32, i32
  }
}

</mosaic_0001>

<llo_original>
// kernel: tpu_custom_call.1
$region0: #{tpu_custom_call.1}
  #allocation0 [shape = 'u32[]', space=smem, size = 0x4, offset = 0x4, fixed_abs, tag = 'smem constant byte address 0x4 - core index']
  #allocation1 [shape = 'u32[144,128]{1,0:T(1,128)}', space=vmem, size = 0x12000, scoped, tag = 'internal scratch']
  #allocation2 [shape = 'f32[2,512]{1,0:T(2,128)}', space=vmem, size = 0x1000, scoped, tag = 'scratch operand']
  %s0 = inlined_call_operand.hbm [shape: f32[2,32,256], index: 0, kind: input, shape index: {}]
  %s1 = inlined_call_operand.vmem [shape: f32[2,32], index: 1, kind: input, shape index: {}]
  %s2 = inlined_call_operand.vmem [shape: f32[32,2], index: 2, kind: input, shape index: {}]
  %s3 = inlined_call_operand.vmem [shape: f32[2,49], index: 3, kind: input, shape index: {}]
  %s4 = inlined_call_operand.hbm [shape: f32[2,32,256], index: 4, kind: output, shape index: {}]
  %s5 = sld [smem:[#allocation0]]
  $region57: #{tpu_custom_call.1} parent=0
    _
  %s7 = ssub.s32 1, %s5
  %s8 = scalar_select 0, %s7, %s5
  $region1: #{tpu_custom_call.1} parent=0
    #allocation3 [shape = 'u8[65536]{0}', space=vmem, size = 0x10000, scoped, tag = 'input window, operand 0']
    #allocation4 [shape = 's32[2]{0}', space=sflag, size = 0x8, scoped, tag = 'scoped memory for tpu_custom_call.1']
    #allocation5 [shape = 's32[2]{0}', space=sflag, size = 0x8, scoped, tag = 'scoped memory for tpu_custom_call.1']
    #allocation6 [shape = 's32[2]{0}', space=sflag, size = 0x8, scoped, tag = 'scoped memory for tpu_custom_call.1']
    #allocation7 [shape = 'u8[1024]{0}', space=smem, size = 0x400, scoped, tag = 'input window, operand 3, single buffered']
    #allocation8 [shape = 'u8[65536]{0}', space=vmem, size = 0x10000, scoped, tag = 'output window, operand 0']
    %9 = vsyncpa [#allocation4], 0
    %s10 = scalar_lea.sflag [#allocation4], 1
    %11 = vsyncpa %s10, 0
    %12 = vsyncpa [#allocation6], 0
    %13 = vsyncpa [#allocation5], 0
    %s14 = scalar_lea.sflag [#allocation5], 1
    %15 = vsyncpa %s14, 0
    loop: start=0, step=1, limit=4
    $region2: #{tpu_custom_call.1} parent=1 // loop_pre_header
      _
    $region3: #{tpu_custom_call.1} parent=1 // loop_header
      %s17 = sphi 0, %s21
      %p18 = scmp.ge.s32.totalorder %s17, 4
      %s27 = sphi 0, %s29
      %s30 = sphi 0, %s27
      %s31 = sphi 0, %s30
      %s47 = sphi 0, %s31
      %s51 = sphi 0, %s51
      %s53 = sphi 0, %s51
      %s54 = sphi 0, %s53
      %s68 = sphi 0, %s54
      %s72 = sphi 0, %s72
      %s74 = sphi 0, %s72
      %s75 = sphi 0, %s74
      %s89 = sphi 0, %s75
      %s93 = sphi 0, %s93
      %s95 = sphi 0, %s93
      %s96 = sphi 0, %s95
      %s110 = sphi 0, %s96
      %s116 = sphi 0, %s118
      %s119 = sphi 0, %s116
      %s120 = sphi 0, %s119
      %s136 = sphi 0, %s120
    $region4: #{tpu_custom_call.1} parent=1 // loop_header_branch
      %20 = sbr.rel (%p18) target = $region8
    $region5: #{tpu_custom_call.1} parent=1 // loop_body
      %s22 = ssub.s32 %s17, 1
      %s23 = ssub.s32 %s17, 2
      %s24 = sadd.s32 %s17, 1
      %s25 = ssub.s32 %s17, %s24
      %p26 = scmp.eq.s32.totalorder %s25, 0
      %s28 = sadd.s32 %s27, 1
      %s29 = scalar_select %p26, %s27, %s28
      %p32 = pneg %p26
      %p33 = scmp.eq.s32.totalorder %s17, 1
      %p34 = por %p32, %p33
      %p35 = scmp.ne.s32.totalorder %s27, %s30
      %p36 = scmp.eq.s32.totalorder %s17, 0
      %p37 = por %p35, %p36
      %p38 = scmp.ne.s32.totalorder %s27, %s30
      %p39 = scmp.eq.s32.totalorder %s22, 1
      %p40 = por %p38, %p39
      %p41 = scmp.ne.s32.totalorder %s30, %s31
      %p42 = scmp.eq.s32.totalorder %s22, 0
      %p43 = por %p41, %p42
      %p44 = scmp.ne.s32.totalorder %s30, %s31
      %p45 = scmp.eq.s32.totalorder %s23, 1
      %p46 = por %p44, %p45
      %p48 = scmp.ne.s32.totalorder %s31, %s47
      %p49 = scmp.eq.s32.totalorder %s23, 0
      %p50 = por %p48, %p49
      %s52 = sadd.s32 %s51, 1
      %p55 = scmp.eq.s32.totalorder %s17, 1
      %p56 = scmp.ne.s32.totalorder %s51, %s53
      %p57 = scmp.eq.s32.totalorder %s17, 0
      %p58 = por %p56, %p57
      %p59 = scmp.ne.s32.totalorder %s51, %s53
      %p60 = scmp.eq.s32.totalorder %s22, 1
      %p61 = por %p59, %p60
      %p62 = scmp.ne.s32.totalorder %s53, %s54
      %p63 = scmp.eq.s32.totalorder %s22, 0
      %p64 = por %p62, %p63
      %p65 = scmp.ne.s32.totalorder %s53, %s54
      %p66 = scmp.eq.s32.totalorder %s23, 1
      %p67 = por %p65, %p66
      %p69 = scmp.ne.s32.totalorder %s54, %s68
      %p70 = scmp.eq.s32.totalorder %s23, 0
      %p71 = por %p69, %p70
      %s73 = sadd.s32 %s72, 1
      %p76 = scmp.eq.s32.totalorder %s17, 1
      %p77 = scmp.ne.s32.totalorder %s72, %s74
      %p78 = scmp.eq.s32.totalorder %s17, 0
      %p79 = por %p77, %p78
      %p80 = scmp.ne.s32.totalorder %s72, %s74
      %p81 = scmp.eq.s32.totalorder %s22, 1
      %p82 = por %p80, %p81
      %p83 = scmp.ne.s32.totalorder %s74, %s75
      %p84 = scmp.eq.s32.totalorder %s22, 0
      %p85 = por %p83, %p84
      %p86 = scmp.ne.s32.totalorder %s74, %s75
      %p87 = scmp.eq.s32.totalorder %s23, 1
      %p88 = por %p86, %p87
      %p90 = scmp.ne.s32.totalorder %s75, %s89
      %p91 = scmp.eq.s32.totalorder %s23, 0
      %p92 = por %p90, %p91
      %s94 = sadd.s32 %s93, 1
      %p97 = scmp.eq.s32.totalorder %s17, 1
      %p98 = scmp.ne.s32.totalorder %s93, %s95
      %p99 = scmp.eq.s32.totalorder %s17, 0
      %p100 = por %p98, %p99
      %p101 = scmp.ne.s32.totalorder %s93, %s95
      %p102 = scmp.eq.s32.totalorder %s22, 1
      %p103 = por %p101, %p102
      %p104 = scmp.ne.s32.totalorder %s95, %s96
      %p105 = scmp.eq.s32.totalorder %s22, 0
      %p106 = por %p104, %p105
      %p107 = scmp.ne.s32.totalorder %s95, %s96
      %p108 = scmp.eq.s32.totalorder %s23, 1
      %p109 = por %p107, %p108
      %p111 = scmp.ne.s32.totalorder %s96, %s110
      %p112 = scmp.eq.s32.totalorder %s23, 0
      %p113 = por %p111, %p112
      %s114 = ssub.s32 %s17, %s24
      %p115 = scmp.eq.s32.totalorder %s114, 0
      %s117 = sadd.s32 %s116, 1
      %s118 = scalar_select %p115, %s116, %s117
      %p121 = pneg %p115
      %p122 = scmp.eq.s32.totalorder %s17, 1
      %p123 = por %p121, %p122
      %p124 = scmp.ne.s32.totalorder %s116, %s119
      %p125 = scmp.eq.s32.totalorder %s17, 0
      %p126 = por %p124, %p125
      %p127 = scmp.ne.s32.totalorder %s116, %s119
      %p128 = scmp.eq.s32.totalorder %s22, 1
      %p129 = por %p127, %p128
      %p130 = scmp.ne.s32.totalorder %s119, %s120
      %p131 = scmp.eq.s32.totalorder %s22, 0
      %p132 = por %p130, %p131
      %p133 = scmp.ne.s32.totalorder %s119, %s120
      %p134 = scmp.eq.s32.totalorder %s23, 1
      %p135 = por %p133, %p134
      %p137 = scmp.ne.s32.totalorder %s120, %s136
      %p138 = scmp.eq.s32.totalorder %s23, 0
      %p139 = por %p137, %p138
      %p140 = scmp.le.s32.totalorder 1, %s17
      %p141 = scmp.lt.s32.totalorder %s17, 3
      %p142 = pnand %p140, %p141
      %p143 = pneg %p142
      // Predicated region
      $region9: #{tpu_custom_call.1} parent=5 // pred_check
        _
      $region10: #{tpu_custom_call.1} parent=5 // pred_check_branch
        %145 = sbr.rel (%p142) target = $region12
      $region11: #{tpu_custom_call.1} parent=5 // pred_region
        %s146 = ssub.s32 %s17, 1
        // Predicated region
        $region13: #{tpu_custom_call.1} parent=11 // pred_check
          %p147 = pneg %p64
        $region14: #{tpu_custom_call.1} parent=11 // pred_check_branch
          %149 = sbr.rel (%p147) target = $region16
        $region15: #{tpu_custom_call.1} parent=11 // pred_region
          _
        $region16: #{tpu_custom_call.1} parent=11 // pred_fallthru
          _
        // Predicated region
        $region17: #{tpu_custom_call.1} parent=11 // pred_check
          %p150 = pneg %p85
        $region18: #{tpu_custom_call.1} parent=11 // pred_check_branch
          %152 = sbr.rel (%p150) target = $region20
        $region19: #{tpu_custom_call.1} parent=11 // pred_region
          _
        $region20: #{tpu_custom_call.1} parent=11 // pred_fallthru
          _
        // Predicated region
        $region21: #{tpu_custom_call.1} parent=11 // pred_check
          %p153 = pneg %p106
        $region22: #{tpu_custom_call.1} parent=11 // pred_check_branch
          %155 = sbr.rel (%p153) target = $region24
        $region23: #{tpu_custom_call.1} parent=11 // pred_region
          %s157 = ssub.s32 32, 32
          %158 = vsyncadd [#allocation6], %s157
          %s160 = sshll.u32 %s3, 4
          %s161 = int_to_ptr.vmem [resolvable:$true] %s160
          %163 = dma.vmem_to_smem %s161, 32, [#allocation7], [#allocation6]
        $region24: #{tpu_custom_call.1} parent=11 // pred_fallthru
          _
      $region12: #{tpu_custom_call.1} parent=5 // pred_fallthru
        _
      %p164 = scmp.lt.s32.totalorder %s17, 2
      // Predicated region
      $region25: #{tpu_custom_call.1} parent=5 // pred_check
        %p165 = pneg %p164
      $region26: #{tpu_custom_call.1} parent=5 // pred_check_branch
        %167 = sbr.rel (%p165) target = $region28
      $region27: #{tpu_custom_call.1} parent=5 // pred_region
        // Predicated region
        $region29: #{tpu_custom_call.1} parent=27 // pred_check
          %p168 = pneg %p37
        $region30: #{tpu_custom_call.1} parent=27 // pred_check_branch
          %170 = sbr.rel (%p168) target = $region32
        $region31: #{tpu_custom_call.1} parent=27 // pred_region
          %s171 = sand.u32 %s27, 1
          %s172 = scalar_lea.sflag [#allocation4], %s171
          %s173 = sand.u32 %s27, 1
          %s174 = smul.addr %s173, 64
          %s175 = scalar_lea.vmem [#allocation3], %s174
          %s177 = ssub.s32 1024, 1024
          %178 = vsyncadd %s172, %s177
          %s179 = smul.addr %s17, 8
          %s180 = smul.addr %s179, 128
          %s181 = scalar_lea.hbm %s0, %s180
          %s182 = sshll.u32 %s175, 4
          %s183 = int_to_ptr.vmem [resolvable:$true] %s182
          %188 = dma.hbm_to_vmem [thread:$0]  %s181, 1024, %s183, %s172, 256, 256, 16
        $region32: #{tpu_custom_call.1} parent=27 // pred_fallthru
          _
      $region28: #{tpu_custom_call.1} parent=5 // pred_fallthru
        _
      %p189 = scmp.le.s32.totalorder 1, %s17
      %p190 = scmp.lt.s32.totalorder %s17, 3
      %p191 = pnand %p189, %p190
      %p192 = pneg %p191
      // Predicated region
      $region33: #{tpu_custom_call.1} parent=5 // pred_check
        _
      $region34: #{tpu_custom_call.1} parent=5 // pred_check_branch
        %194 = sbr.rel (%p191) target = $region36
      $region35: #{tpu_custom_call.1} parent=5 // pred_region
        %s195 = ssub.s32 %s17, 1
        %s196 = sand.u32 %s30, 1
        %s197 = scalar_lea.sflag [#allocation4], %s196
        %s198 = sand.u32 %s30, 1
        %s199 = smul.addr %s198, 64
        %s200 = scalar_lea.vmem [#allocation3], %s199
        // Predicated region
        $region37: #{tpu_custom_call.1} parent=35 // pred_check
          %p201 = pneg %p43
        $region38: #{tpu_custom_call.1} parent=35 // pred_check_branch
          %203 = sbr.rel (%p201) target = $region40
        $region39: #{tpu_custom_call.1} parent=35 // pred_region
          %204 = dma.done %s197, 1024
        $region40: #{tpu_custom_call.1} parent=35 // pred_fallthru
          _
        // Predicated region
        $region41: #{tpu_custom_call.1} parent=35 // pred_check
          %p205 = pneg %p106
        $region42: #{tpu_custom_call.1} parent=35 // pred_check_branch
          %207 = sbr.rel (%p205) target = $region44
        $region43: #{tpu_custom_call.1} parent=35 // pred_region
          %208 = dma.done [#allocation6], 32
        $region44: #{tpu_custom_call.1} parent=35 // pred_fallthru
          _
        %209 = sfence
        %s210 = sand.u32 %s30, 1
        %s211 = scalar_lea.sflag [#allocation4], %s210
        %s212 = sand.u32 %s30, 1
        %s213 = smul.addr %s212, 64
        %s214 = scalar_lea.vmem [#allocation3], %s213
        %p215 = pneg %p43
        %p216 = pneg %p40
        %p217 = pneg %p64
        %p218 = pneg %p61
        %p219 = pneg %p85
        %p220 = pneg %p82
        %p221 = pneg %p106
        %p222 = pneg %p103
        %p223 = pneg %p132
        %p224 = pneg %p129
        %s225 = sand.u32 %s119, 1
        %s226 = scalar_lea.sflag [#allocation5], %s225
        %s227 = sand.u32 %s119, 1
        %s228 = smul.addr %s227, 64
        %s229 = scalar_lea.vmem [#allocation8], %s228
        %v230 = vld [vmem:[%s200] sm:$0xff]
        %v231 = vld [vmem:[%s200 + $0x8] sm:$0xff]
        %v232 = vld [vmem:[%s200 + $0x10] sm:$0xff]
        %v233 = vld [vmem:[%s200 + $0x18] sm:$0xff]
        %v234 = vld [vmem:[%s200 + $0x20] sm:$0xff]
        %v235 = vld [vmem:[%s200 + $0x28] sm:$0xff]
        %v236 = vld [vmem:[%s200 + $0x30] sm:$0xff]
        %v237 = vld [vmem:[%s200 + $0x38] sm:$0xff]
        %v238 = vadd.f32 %v230, %v231
        %239 = vadd.xlane.f32.xlu0 %v238
        %v240 = vpop.xlane.xlu0 %239
        %v241 = vadd.f32 %v232, %v233
        %242 = vadd.xlane.f32.xlu0 %v241
        %v243 = vpop.xlane.xlu0 %242
        %v244 = vadd.f32 %v234, %v235
        %245 = vadd.xlane.f32.xlu0 %v244
        %v246 = vpop.xlane.xlu0 %245
        %v247 = vadd.f32 %v236, %v237
        %248 = vadd.xlane.f32.xlu0 %v247
        %v249 = vpop.xlane.xlu0 %248
        %v250 = vrcp.pop 256.0
        %v251 = vmul.f32 %v240, %v250
        %v252 = vmul.f32 %v243, %v250
        %v253 = vmul.f32 %v246, %v250
        %v254 = vmul.f32 %v249, %v250
        %v255 = vmax.f32 %v230, %v231
        %256 = vmax.xlane.f32.xlu0 %v255
        %v257 = vpop.xlane.xlu0 %256
        %v258 = vmax.f32 %v232, %v233
        %259 = vmax.xlane.f32.xlu0 %v258
        %v260 = vpop.xlane.xlu0 %259
        %v261 = vmax.f32 %v234, %v235
        %262 = vmax.xlane.f32.xlu0 %v261
        %v263 = vpop.xlane.xlu0 %262
        %v264 = vmax.f32 %v236, %v237
        %265 = vmax.xlane.f32.xlu0 %v264
        %v266 = vpop.xlane.xlu0 %265
        %v267 = vlaneseq
        %v268 = vand.u32 %v267, 127
        %vm269 = vcmp.eq.s32.totalorder %v268, 0
        %v270 = vsel %vm269, %v251, %v257
        %v271 = vsel %vm269, %v252, %v260
        %v272 = vsel %vm269, %v253, %v263
        %v273 = vsel %vm269, %v254, %v266
        %v274 = vld [vmem:[%s1] sm:$0x3]
        %vm275 = vcmask 261120
        %v277 = vsel %vm275, %v274, 0
        %279 = vmatprep.subr.mxu0 0.0
        %280 = vmatpush1.msra.mxu0 %v270
        %281 = vmatprep.subr.mxu0 0.0
        %282 = vmatpush1.msra.mxu0 %v271
        %283 = vmatprep.subr.mxu0 0.0
        %284 = vmatpush1.msra.mxu0 %v272
        %285 = vmatprep.subr.mxu0 0.0
        %286 = vmatpush1.msra.mxu0 %v273
        %287 = vmatprep.subr.mxu0 0.0
        %288 = vmatpush1.msra.mxu0 0.0
        %289 = vmatprep.subr.mxu0 0.0
        %290 = vmatpush1.msra.mxu0 0.0
        %291 = vmatprep.subr.mxu0 0.0
        %292 = vmatpush1.msra.mxu0 0.0
        %293 = vmatprep.subr.mxu0 0.0
        %294 = vmatpush1.msra.mxu0 0.0
        %295 = vmatprep.subr.mxu0 0.0
        %296 = vmatpush1.msra.mxu0 0.0
        %297 = vmatprep.subr.mxu0 0.0
        %298 = vmatpush1.msra.mxu0 0.0
        %299 = vmatprep.subr.mxu0 0.0
        %300 = vmatpush1.msra.mxu0 0.0
        %301 = vmatprep.subr.mxu0 0.0
        %302 = vmatpush1.msra.mxu0 0.0
        %303 = vmatprep.subr.mxu0 0.0
        %304 = vmatpush1.msra.mxu0 0.0
        %305 = vmatprep.subr.mxu0 0.0
        %306 = vmatpush1.msra.mxu0 0.0
        %307 = vmatprep.subr.mxu0 0.0
        %308 = vmatpush1.msra.mxu0 0.0
        %309 = vmatprep.subr.mxu0 0.0
        %310 = vmatpush1.msra.mxu0 0.0
        %311 = vmatprep.subr.mxu0 0.0
        %312 = vmatpush1.msra.mxu0 0.0
        %313 = vmatprep.subr.mxu0 0.0
        %314 = vmatpush1.msra.mxu0 0.0
        %315 = vmatprep.subr.mxu0 0.0
        %316 = vmatpush1.msra.mxu0 0.0
        %317 = vmatprep.subr.mxu0 0.0
        %318 = vmatpush1.msra.mxu0 0.0
        %319 = vmatprep.subr.mxu0 0.0
        %320 = vmatpush1.msra.mxu0 0.0
        %321 = vmatprep.subr.mxu0 0.0
        %322 = vmatpush1.msra.mxu0 0.0
        %323 = vmatprep.subr.mxu0 0.0
        %324 = vmatpush1.msra.mxu0 0.0
        %325 = vmatprep.subr.mxu0 0.0
        %326 = vmatpush1.msra.mxu0 0.0
        %327 = vmatprep.subr.mxu0 0.0
        %328 = vmatpush1.msra.mxu0 0.0
        %329 = vmatprep.subr.mxu0 0.0
        %330 = vmatpush1.msra.mxu0 0.0
        %331 = vmatprep.subr.mxu0 0.0
        %332 = vmatpush1.msra.mxu0 0.0
        %333 = vmatprep.subr.mxu0 0.0
        %334 = vmatpush1.msra.mxu0 0.0
        %335 = vmatprep.subr.mxu0 0.0
        %336 = vmatpush1.msra.mxu0 0.0
        %337 = vmatprep.subr.mxu0 0.0
        %338 = vmatpush1.msra.mxu0 0.0
        %339 = vmatprep.subr.mxu0 0.0
        %340 = vmatpush1.msra.mxu0 0.0
        %341 = vmatprep.subr.mxu0 0.0
        %342 = vmatpush1.msra.mxu0 0.0
        %343 = vmatprep.mubr.f32.mxu0 0.0
        %344 = vmatmul.mubr.f32.gmra.mrb[0].mxu0 %v277
        %v345 = vpop.f32.mrb[0].mxu0
        %v346 = vadd.f32 0.0, %v345
        %v347 = vpop.f32.mrb[0].mxu0
        %348 = vdwg.mxu0
        %v349 = vmax.f32 %v346, 0.0
        %v350 = vld [vmem:[%s2] sm:$0xff]
        %v351 = vld [vmem:[%s2 + $0x8] sm:$0xff]
        %v352 = vld [vmem:[%s2 + $0x10] sm:$0xff]
        %v353 = vld [vmem:[%s2 + $0x18] sm:$0xff]
        %vm354 = vcmask 15360
        %v356 = vsel %vm354, %v350, 0
        %v359 = vsel %vm354, %v351, 0
        %v362 = vsel %vm354, %v352, 0
        %v365 = vsel %vm354, %v353, 0
        %vm367 = vcmask 1041408
        %v369 = vsel %vm367, %v349, 0
        %371 = vmatprep.subr.mxu0 0.0
        %372 = vmatpush1.msra.mxu0 %v369
        %373 = vmatprep.subr.mxu0 0.0
        %374 = vmatpush1.msra.mxu0 0.0
        %375 = vmatprep.subr.mxu0 0.0
        %376 = vmatpush1.msra.mxu0 0.0
        %377 = vmatprep.subr.mxu0 0.0
        %378 = vmatpush1.msra.mxu0 0.0
        %379 = vmatprep.subr.mxu0 0.0
        %380 = vmatpush1.msra.mxu0 0.0
        %381 = vmatprep.subr.mxu0 0.0
        %382 = vmatpush1.msra.mxu0 0.0
        %383 = vmatprep.subr.mxu0 0.0
        %384 = vmatpush1.msra.mxu0 0.0
        %385 = vmatprep.subr.mxu0 0.0
        %386 = vmatpush1.msra.mxu0 0.0
        %387 = vmatprep.subr.mxu0 0.0
        %388 = vmatpush1.msra.mxu0 0.0
        %389 = vmatprep.subr.mxu0 0.0
        %390 = vmatpush1.msra.mxu0 0.0
        %391 = vmatprep.subr.mxu0 0.0
        %392 = vmatpush1.msra.mxu0 0.0
        %393 = vmatprep.subr.mxu0 0.0
        %394 = vmatpush1.msra.mxu0 0.0
        %395 = vmatprep.subr.mxu0 0.0
        %396 = vmatpush1.msra.mxu0 0.0
        %397 = vmatprep.subr.mxu0 0.0
        %398 = vmatpush1.msra.mxu0 0.0
        %399 = vmatprep.subr.mxu0 0.0
        %400 = vmatpush1.msra.mxu0 0.0
        %401 = vmatprep.subr.mxu0 0.0
        %402 = vmatpush1.msra.mxu0 0.0
        %403 = vmatprep.subr.mxu0 0.0
        %404 = vmatpush1.msra.mxu0 0.0
        %405 = vmatprep.subr.mxu0 0.0
        %406 = vmatpush1.msra.mxu0 0.0
        %407 = vmatprep.subr.mxu0 0.0
        %408 = vmatpush1.msra.mxu0 0.0
        %409 = vmatprep.subr.mxu0 0.0
        %410 = vmatpush1.msra.mxu0 0.0
        %411 = vmatprep.subr.mxu0 0.0
        %412 = vmatpush1.msra.mxu0 0.0
        %413 = vmatprep.subr.mxu0 0.0
        %414 = vmatpush1.msra.mxu0 0.0
        %415 = vmatprep.subr.mxu0 0.0
        %416 = vmatpush1.msra.mxu0 0.0
        %417 = vmatprep.subr.mxu0 0.0
        %418 = vmatpush1.msra.mxu0 0.0
        %419 = vmatprep.subr.mxu0 0.0
        %420 = vmatpush1.msra.mxu0 0.0
        %421 = vmatprep.subr.mxu0 0.0
        %422 = vmatpush1.msra.mxu0 0.0
        %423 = vmatprep.subr.mxu0 0.0
        %424 = vmatpush1.msra.mxu0 0.0
        %425 = vmatprep.subr.mxu0 0.0
        %426 = vmatpush1.msra.mxu0 0.0
        %427 = vmatprep.subr.mxu0 0.0
        %428 = vmatpush1.msra.mxu0 0.0
        %429 = vmatprep.subr.mxu0 0.0
        %430 = vmatpush1.msra.mxu0 0.0
        %431 = vmatprep.subr.mxu0 0.0
        %432 = vmatpush1.msra.mxu0 0.0
        %433 = vmatprep.subr.mxu0 0.0
        %434 = vmatpush1.msra.mxu0 0.0
        %435 = vmatprep.mubr.f32.mxu0 0.0
        %436 = vmatmul.mubr.f32.gmra.mrb[0].mxu0 %v356
        %v437 = vpop.f32.mrb[0].mxu0
        %v438 = vadd.f32 0.0, %v437
        %v439 = vpop.f32.mrb[0].mxu0
        %440 = vmatprep.mubr.f32.mxu0 0.0
        %441 = vmatmul.mubr.f32.gmra.mrb[0].mxu0 %v359
        %v442 = vpop.f32.mrb[0].mxu0
        %v443 = vadd.f32 0.0, %v442
        %v444 = vpop.f32.mrb[0].mxu0
        %445 = vmatprep.mubr.f32.mxu0 0.0
        %446 = vmatmul.mubr.f32.gmra.mrb[0].mxu0 %v362
        %v447 = vpop.f32.mrb[0].mxu0
        %v448 = vadd.f32 0.0, %v447
        %v449 = vpop.f32.mrb[0].mxu0
        %450 = vmatprep.mubr.f32.mxu0 0.0
        %451 = vmatmul.mubr.f32.gmra.mrb[0].mxu0 %v365
        %v452 = vpop.f32.mrb[0].mxu0
        %v453 = vadd.f32 0.0, %v452
        %v454 = vpop.f32.mrb[0].mxu0
        %455 = vdwg.mxu0
        %460 = vrot.lane.b32.xlu0 %v438, 127
        %v461 = vpop.permute.xlu0 %460
        %462 = vrot.lane.b32.xlu0 %v443, 127
        %v463 = vpop.permute.xlu0 %462
        %464 = vrot.lane.b32.xlu0 %v448, 127
        %v465 = vpop.permute.xlu0 %464
        %466 = vrot.lane.b32.xlu0 %v453, 127
        %v467 = vpop.permute.xlu0 %466
        %v472 = vadd.f32 %v438, %v461
        %v473 = vadd.f32 %v443, %v463
        %v474 = vadd.f32 %v448, %v465
        %v475 = vadd.f32 %v453, %v467
        %v476 = vxor.u32 %v472, 2147483648
        %v477 = vxor.u32 %v473, 2147483648
        %v478 = vxor.u32 %v474, 2147483648
        %v479 = vxor.u32 %v475, 2147483648
        %v480 = vmul.f32 %v476, 1.442695
        %v481 = vpow.pop %v480
        %v482 = vmul.f32 %v477, 1.442695
        %v483 = vpow.pop %v482
        %v484 = vmul.f32 %v478, 1.442695
        %v485 = vpow.pop %v484
        %v486 = vmul.f32 %v479, 1.442695
        %v487 = vpow.pop %v486
        %v488 = vadd.f32 %v481, 1.0
        %v489 = vadd.f32 %v483, 1.0
        %v490 = vadd.f32 %v485, 1.0
        %v491 = vadd.f32 %v487, 1.0
        %v492 = vrcp.pop %v488
        %v493 = vmul.f32 1.0, %v492
        %v494 = vrcp.pop %v489
        %v495 = vmul.f32 1.0, %v494
        %v496 = vrcp.pop %v490
        %v497 = vmul.f32 1.0, %v496
        %v498 = vrcp.pop %v491
        %v499 = vmul.f32 1.0, %v498
        %501 = vset.pattern.permute.xlu0 0
        %502 = vperm.xlu0 %501, %v493
        %v503 = vpop.permute.xlu0 %502
        %506 = vset.pattern.permute.xlu0 0
        %507 = vperm.xlu0 %506, %v495
        %v508 = vpop.permute.xlu0 %507
        %511 = vset.pattern.permute.xlu0 0
        %512 = vperm.xlu0 %511, %v497
        %v513 = vpop.permute.xlu0 %512
        %516 = vset.pattern.permute.xlu0 0
        %517 = vperm.xlu0 %516, %v499
        %v518 = vpop.permute.xlu0 %517
        %v520 = vmul.f32 %v230, %v503
        %v521 = vmul.f32 %v231, %v503
        %v522 = vmul.f32 %v232, %v508
        %v523 = vmul.f32 %v233, %v508
        %v524 = vmul.f32 %v234, %v513
        %v525 = vmul.f32 %v235, %v513
        %v526 = vmul.f32 %v236, %v518
        %v527 = vmul.f32 %v237, %v518
        %v528 = vadd.f32 %v520, %v522
        %v529 = vadd.f32 %v528, %v524
        %v530 = vadd.f32 %v529, %v526
        %v531 = vrot.slane %v530, 4
        %v532 = vadd.f32 %v530, %v531
        %v533 = vrot.slane %v532, 2
        %v534 = vadd.f32 %v532, %v533
        %v535 = vrot.slane %v534, 1
        %v536 = vadd.f32 %v534, %v535
        %v537 = vadd.f32 %v521, %v523
        %v538 = vadd.f32 %v537, %v525
        %v539 = vadd.f32 %v538, %v527
        %v540 = vrot.slane %v539, 4
        %v541 = vadd.f32 %v539, %v540
        %v542 = vrot.slane %v541, 2
        %v543 = vadd.f32 %v541, %v542
        %v544 = vrot.slane %v543, 1
        %v545 = vadd.f32 %v543, %v544
        %v546 = vrcp.pop 32.0
        %v547 = vmul.f32 %v536, %v546
        %v548 = vmul.f32 %v545, %v546
        %v549 = vmax.f32 %v520, %v524
        %v550 = vmax.f32 %v522, %v526
        %v551 = vmax.f32 %v549, %v550
        %v552 = vrot.slane %v551, 4
        %v553 = vmax.f32 %v551, %v552
        %v554 = vrot.slane %v553, 2
        %v555 = vmax.f32 %v553, %v554
        %v556 = vrot.slane %v555, 1
        %v557 = vmax.f32 %v555, %v556
        %v558 = vmax.f32 %v521, %v525
        %v559 = vmax.f32 %v523, %v527
        %v560 = vmax.f32 %v558, %v559
        %v561 = vrot.slane %v560, 4
        %v562 = vmax.f32 %v560, %v561
        %v563 = vrot.slane %v562, 2
        %v564 = vmax.f32 %v562, %v563
        %v565 = vrot.slane %v564, 1
        %v566 = vmax.f32 %v564, %v565
        %567 = vst [vmem:[#allocation2] sm:$0xff] 0.0
        %v570 = vcombine.low %v547, %v548
        %v572 = vunpack.c.l.s4 1966171168
        %v573 = vunpack.c.0.s8 %v572
        %v574 = vlaneseq
        %v575 = vshrl.u32 %v574, 7
        %v576 = vsub.s32 %v573, %v575
        %v577 = vrot.slane %v570, %v576
        %v579 = vunpack.c.l.s4 1966171168
        %v580 = vunpack.c.0.s8 %v579
        %v581 = vlaneseq
        %v582 = vshrl.u32 %v581, 7
        %v583 = vsub.s32 %v580, %v582
        %v584 = vrot.slane %v577, %v583
        %v586 = vlaneseq
        %vm587 = vcmp.ge.s32.totalorder %v586, 0
        %vm588 = vcmp.lt.s32.totalorder %v586, 256
        %vm589 = vmand %vm587, %vm588
        %s590 = scalar_lea.vmem [#allocation2], 2
        %591 = vst.msk [vmem:[%s590] ss:$2 sm:$0x3] %vm589, %v584
        %v594 = vcombine.low %v557, %v566
        %v596 = vunpack.c.l.s4 1966171168
        %v597 = vunpack.c.0.s8 %v596
        %v598 = vlaneseq
        %v599 = vshrl.u32 %v598, 7
        %v600 = vsub.s32 %v597, %v599
        %v601 = vrot.slane %v594, %v600
        %v603 = vunpack.c.l.s4 1966171168
        %v604 = vunpack.c.0.s8 %v603
        %v605 = vlaneseq
        %v606 = vshrl.u32 %v605, 7
        %v607 = vsub.s32 %v604, %v606
        %v608 = vrot.slane %v601, %v607
        %s610 = scalar_lea.vmem [#allocation2], 3
        %611 = vst.msk [vmem:[%s610] ss:$2 sm:$0x3] %vm589, %v608
        %v612 = vld [vmem:[#allocation2] sm:$0xff]
        %v613 = vadd.s32 %v268, 128
        %vm614 = vcmp.lt.s32.totalorder %v268, 0
        %v615 = vsub.s32 0, %v268
        %v616 = vsel %vm614, %v615, %v268
        %v617 = vshrl.u32 %v616, 4
        %v618 = vand.u32 %v616, 15
        %v619 = vsub.s32 0, %v618
        %v620 = vsel %vm614, %v619, %v618
        %vm621 = vcmp.lt.s32.totalorder %v613, 0
        %v622 = vsub.s32 0, %v613
        %v623 = vsel %vm621, %v622, %v613
        %v624 = vshrl.u32 %v623, 4
        %v625 = vand.u32 %v623, 15
        %v626 = vsub.s32 0, %v625
        %v627 = vsel %vm621, %v626, %v625
        %vm628 = vcmp.ne.s32.totalorder %v620, 0
        %vm629 = vcmp.ne.s32.totalorder %v627, 0
        %vm630 = vcmp.lt.s32.totalorder %v620, 0
        %vm631 = vcmp.lt.s32.totalorder %v627, 0
        %vm632 = vmand %vm630, %vm628
        %vm633 = vmand %vm631, %vm629
        %v634 = vadd.s32 %v620, 16
        %v635 = vadd.s32 %v627, 16
        %v636 = vsel %vm632, %v634, %v620
        %v637 = vsel %vm633, %v635, %v627
        %s638 = sld [smem:[#allocation7]]
        %v639 = vstv %s638
        %v640 = vmul.f32 %v639, %v612
        %v641 = vadd.f32 %v640, 0.0
        %s642 = sld [smem:[#allocation7 + $0x80]]
        %v643 = vstv %s642
        %v644 = vmul.f32 %v643, %v612
        %v646 = vrot.slane %v644, 7
        %v647 = vrot.slane %v646, 2
        %v649 = vadd.f32 %v641, %v647
        %s650 = sld [smem:[#allocation7 + $0x7]]
        %v651 = vstv %s650
        %v652 = vmul.f32 %v651, %v612
        %654 = vrot.lane.b32.xlu0 %v652, 112
        %v655 = vpop.permute.xlu0 %654
        %v656 = vrot.slane %v655, 2
        %vm657 = vcmask 916480
        %v658 = vsel %vm657, %v655, %v656
        %v660 = vadd.f32 %v649, %v658
        %s661 = sld [smem:[#allocation7 + $0x87]]
        %v662 = vstv %s661
        %v663 = vmul.f32 %v662, %v612
        %v665 = vrot.slane %v663, 7
        %v666 = vrot.slane %v665, 2
        %667 = vrot.lane.b32.xlu0 %v666, 112
        %v668 = vpop.permute.xlu0 %667
        %v669 = vrot.slane %v668, 2
        %v670 = vsel %vm657, %v668, %v669
        %v672 = vadd.f32 %v660, %v670
        %s673 = sld [smem:[#allocation7 + $0xe]]
        %v674 = vstv %s673
        %v675 = vmul.f32 %v674, %v612
        %677 = vrot.lane.b32.xlu0 %v675, 96
        %v678 = vpop.permute.xlu0 %677
        %v679 = vrot.slane %v678, 2
        %vm680 = vcmask 785408
        %v681 = vsel %vm680, %v678, %v679
        %v683 = vadd.f32 %v672, %v681
        %s684 = sld [smem:[#allocation7 + $0x8e]]
        %v685 = vstv %s684
        %v686 = vmul.f32 %v685, %v612
        %v688 = vrot.slane %v686, 7
        %v689 = vrot.slane %v688, 2
        %690 = vrot.lane.b32.xlu0 %v689, 96
        %v691 = vpop.permute.xlu0 %690
        %v692 = vrot.slane %v691, 2
        %v693 = vsel %vm680, %v691, %v692
        %v695 = vadd.f32 %v683, %v693
        %s696 = sld [smem:[#allocation7 + $0x15]]
        %v697 = vstv %s696
        %v698 = vmul.f32 %v697, %v612
        %700 = vrot.lane.b32.xlu0 %v698, 80
        %v701 = vpop.permute.xlu0 %700
        %v702 = vrot.slane %v701, 2
        %vm703 = vcmask 654336
        %v704 = vsel %vm703, %v701, %v702
        %v706 = vadd.f32 %v695, %v704
        %s707 = sld [smem:[#allocation7 + $0x95]]
        %v708 = vstv %s707
        %v709 = vmul.f32 %v708, %v612
        %v711 = vrot.slane %v709, 7
        %v712 = vrot.slane %v711, 2
        %713 = vrot.lane.b32.xlu0 %v712, 80
        %v714 = vpop.permute.xlu0 %713
        %v715 = vrot.slane %v714, 2
        %v716 = vsel %vm703, %v714, %v715
        %v718 = vadd.f32 %v706, %v716
        %s719 = sld [smem:[#allocation7 + $0x1c]]
        %v720 = vstv %s719
        %722 = vrot.lane.b32.xlu0 %v612, 115
        %v723 = vpop.permute.xlu0 %722
        %v724 = vrot.slane %v723, 2
        %v725 = vrot.slane %v723, 4
        %vm726 = vcmask 941056
        %v727 = vsel %vm726, %v724, %v725
        %v729 = vmul.f32 %v720, %v727
        %731 = vrot.lane.b32.xlu0 %v729, 77
        %v732 = vpop.permute.xlu0 %731
        %v733 = vrot.slane %v732, 6
        %vm734 = vcmask 629760
        %v735 = vsel %vm734, %v733, %v732
        %v737 = vadd.f32 %v718, %v735
        %s738 = sld [smem:[#allocation7 + $0x9c]]
        %v739 = vstv %s738
        %v740 = vmul.f32 %v739, %v727
        %v742 = vrot.slane %v740, 7
        %v743 = vrot.slane %v742, 2
        %744 = vrot.lane.b32.xlu0 %v743, 77
        %v745 = vpop.permute.xlu0 %744
        %v746 = vrot.slane %v745, 6
        %v747 = vsel %vm734, %v746, %v745
        %v749 = vadd.f32 %v737, %v747
        %s750 = sld [smem:[#allocation7 + $0x23]]
        %v751 = vstv %s750
        %752 = vrot.lane.b32.xlu0 %v612, 99
        %v753 = vpop.permute.xlu0 %752
        %v754 = vrot.slane %v753, 2
        %v755 = vrot.slane %v753, 4
        %vm756 = vcmask 809984
        %v757 = vsel %vm756, %v754, %v755
        %v759 = vmul.f32 %v751, %v757
        %761 = vrot.lane.b32.xlu0 %v759, 77
        %v762 = vpop.permute.xlu0 %761
        %v763 = vrot.slane %v762, 6
        %v764 = vsel %vm734, %v763, %v762
        %v766 = vadd.f32 %v749, %v764
        %s767 = sld [smem:[#allocation7 + $0xa3]]
        %v768 = vstv %s767
        %v769 = vmul.f32 %v768, %v757
        %v771 = vrot.slane %v769, 7
        %v772 = vrot.slane %v771, 2
        %773 = vrot.lane.b32.xlu0 %v772, 77
        %v774 = vpop.permute.xlu0 %773
        %v775 = vrot.slane %v774, 6
        %v776 = vsel %vm734, %v775, %v774
        %v778 = vadd.f32 %v766, %v776
        %s779 = sld [smem:[#allocation7 + $0x2a]]
        %v780 = vstv %s779
        %781 = vrot.lane.b32.xlu0 %v612, 83
        %v782 = vpop.permute.xlu0 %781
        %v783 = vrot.slane %v782, 2
        %v784 = vrot.slane %v782, 4
        %vm785 = vcmask 678912
        %v786 = vsel %vm785, %v783, %v784
        %v788 = vmul.f32 %v780, %v786
        %790 = vrot.lane.b32.xlu0 %v788, 77
        %v791 = vpop.permute.xlu0 %790
        %v792 = vrot.slane %v791, 6
        %v793 = vsel %vm734, %v792, %v791
        %v795 = vadd.f32 %v778, %v793
        %s796 = sld [smem:[#allocation7 + $0xaa]]
        %v797 = vstv %s796
        %v798 = vmul.f32 %v797, %v786
        %v800 = vrot.slane %v798, 7
        %v801 = vrot.slane %v800, 2
        %802 = vrot.lane.b32.xlu0 %v801, 77
        %v803 = vpop.permute.xlu0 %802
        %v804 = vrot.slane %v803, 6
        %v805 = vsel %vm734, %v804, %v803
        %v807 = vadd.f32 %v795, %v805
        %vm808 = vcmp.ge.s32.totalorder %v636, 3
        %vm809 = vcmp.ge.s32.totalorder %v637, 3
        %vm810 = vcmp.lt.s32.totalorder %v636, 19
        %vm811 = vcmp.lt.s32.totalorder %v637, 19
        %vm812 = vmand %vm808, %vm810
        %vm813 = vmand %vm809, %vm811
        %v815 = vlaneseq
        %v816 = vshrl.u32 %v815, 7
        %v817 = vsub.s32 0, %v816
        %v818 = vrot.slane %v807, %v817
        %v819 = vlaneseq
        %v820 = vshrl.u32 %v819, 7
        %v821 = vsub.s32 2, %v820
        %v822 = vrot.slane %v807, %v821
        %v823 = vlaneseq
        %v824 = vshrl.u32 %v823, 7
        %v825 = vsub.s32 4, %v824
        %v826 = vrot.slane %v807, %v825
        %827 = vrot.lane.b32.xlu0 %v818, 51
        %v828 = vpop.permute.xlu0 %827
        %829 = vrot.lane.b32.xlu0 %v822, 51
        %v830 = vpop.permute.xlu0 %829
        %831 = vrot.lane.b32.xlu0 %v826, 51
        %v832 = vpop.permute.xlu0 %831
        %vm833 = vcmask 416768
        %v834 = vsel %vm833, %v828, %v830
        %v835 = vsel %vm833, %v830, %v832
        %v838 = vsel %vm812, %v834, 0.0
        %v839 = vsel %vm813, %v835, 0.0
        %v840 = vadd.f32 %v838, 0.0
        %v841 = vadd.f32 %v839, 0.0
        %s842 = sld [smem:[#allocation7 + $0x1]]
        %v843 = vstv %s842
        %v844 = vmul.f32 %v843, %v612
        %v845 = vadd.f32 %v844, 0.0
        %s846 = sld [smem:[#allocation7 + $0x81]]
        %v847 = vstv %s846
        %v848 = vmul.f32 %v847, %v612
        %v850 = vrot.slane %v848, 7
        %v851 = vrot.slane %v850, 2
        %v853 = vadd.f32 %v845, %v851
        %s854 = sld [smem:[#allocation7 + $0x8]]
        %v855 = vstv %s854
        %v856 = vmul.f32 %v855, %v612
        %858 = vrot.lane.b32.xlu0 %v856, 112
        %v859 = vpop.permute.xlu0 %858
        %v860 = vrot.slane %v859, 2
        %v861 = vsel %vm657, %v859, %v860
        %v863 = vadd.f32 %v853, %v861
        %s864 = sld [smem:[#allocation7 + $0x88]]
        %v865 = vstv %s864
        %v866 = vmul.f32 %v865, %v612
        %v868 = vrot.slane %v866, 7
        %v869 = vrot.slane %v868, 2
        %870 = vrot.lane.b32.xlu0 %v869, 112
        %v871 = vpop.permute.xlu0 %870
        %v872 = vrot.slane %v871, 2
        %v873 = vsel %vm657, %v871, %v872
        %v875 = vadd.f32 %v863, %v873
        %s876 = sld [smem:[#allocation7 + $0xf]]
        %v877 = vstv %s876
        %v878 = vmul.f32 %v877, %v612
        %880 = vrot.lane.b32.xlu0 %v878, 96
        %v881 = vpop.permute.xlu0 %880
        %v882 = vrot.slane %v881, 2
        %v883 = vsel %vm680, %v881, %v882
        %v885 = vadd.f32 %v875, %v883
        %s886 = sld [smem:[#allocation7 + $0x8f]]
        %v887 = vstv %s886
        %v888 = vmul.f32 %v887, %v612
        %v890 = vrot.slane %v888, 7
        %v891 = vrot.slane %v890, 2
        %892 = vrot.lane.b32.xlu0 %v891, 96
        %v893 = vpop.permute.xlu0 %892
        %v894 = vrot.slane %v893, 2
        %v895 = vsel %vm680, %v893, %v894
        %v897 = vadd.f32 %v885, %v895
        %s898 = sld [smem:[#allocation7 + $0x16]]
        %v899 = vstv %s898
        %v900 = vmul.f32 %v899, %v612
        %902 = vrot.lane.b32.xlu0 %v900, 80
        %v903 = vpop.permute.xlu0 %902
        %v904 = vrot.slane %v903, 2
        %v905 = vsel %vm703, %v903, %v904
        %v907 = vadd.f32 %v897, %v905
        %s908 = sld [smem:[#allocation7 + $0x96]]
        %v909 = vstv %s908
        %v910 = vmul.f32 %v909, %v612
        %v912 = vrot.slane %v910, 7
        %v913 = vrot.slane %v912, 2
        %914 = vrot.lane.b32.xlu0 %v913, 80
        %v915 = vpop.permute.xlu0 %914
        %v916 = vrot.slane %v915, 2
        %v917 = vsel %vm703, %v915, %v916
        %v919 = vadd.f32 %v907, %v917
        %s920 = sld [smem:[#allocation7 + $0x1d]]
        %v921 = vstv %s920
        %922 = vrot.lane.b32.xlu0 %v612, 114
        %v923 = vpop.permute.xlu0 %922
        %v924 = vrot.slane %v923, 2
        %v925 = vrot.slane %v923, 4
        %vm926 = vcmask 932864
        %v927 = vsel %vm926, %v924, %v925
        %v929 = vmul.f32 %v921, %v927
        %931 = vrot.lane.b32.xlu0 %v929, 78
        %v932 = vpop.permute.xlu0 %931
        %v933 = vrot.slane %v932, 6
        %vm934 = vcmask 637952
        %v935 = vsel %vm934, %v933, %v932
        %v937 = vadd.f32 %v919, %v935
        %s938 = sld [smem:[#allocation7 + $0x9d]]
        %v939 = vstv %s938
        %v940 = vmul.f32 %v939, %v927
        %v942 = vrot.slane %v940, 7
        %v943 = vrot.slane %v942, 2
        %944 = vrot.lane.b32.xlu0 %v943, 78
        %v945 = vpop.permute.xlu0 %944
        %v946 = vrot.slane %v945, 6
        %v947 = vsel %vm934, %v946, %v945
        %v949 = vadd.f32 %v937, %v947
        %s950 = sld [smem:[#allocation7 + $0x24]]
        %v951 = vstv %s950
        %952 = vrot.lane.b32.xlu0 %v612, 98
        %v953 = vpop.permute.xlu0 %952
        %v954 = vrot.slane %v953, 2
        %v955 = vrot.slane %v953, 4
        %vm956 = vcmask 801792
        %v957 = vsel %vm956, %v954, %v955
        %v959 = vmul.f32 %v951, %v957
        %961 = vrot.lane.b32.xlu0 %v959, 78
        %v962 = vpop.permute.xlu0 %961
        %v963 = vrot.slane %v962, 6
        %v964 = vsel %vm934, %v963, %v962
        %v966 = vadd.f32 %v949, %v964
        %s967 = sld [smem:[#allocation7 + $0xa4]]
        %v968 = vstv %s967
        %v969 = vmul.f32 %v968, %v957
        %v971 = vrot.slane %v969, 7
        %v972 = vrot.slane %v971, 2
        %973 = vrot.lane.b32.xlu0 %v972, 78
        %v974 = vpop.permute.xlu0 %973
        %v975 = vrot.slane %v974, 6
        %v976 = vsel %vm934, %v975, %v974
        %v978 = vadd.f32 %v966, %v976
        %s979 = sld [smem:[#allocation7 + $0x2b]]
        %v980 = vstv %s979
        %981 = vrot.lane.b32.xlu0 %v612, 82
        %v982 = vpop.permute.xlu0 %981
        %v983 = vrot.slane %v982, 2
        %v984 = vrot.slane %v982, 4
        %vm985 = vcmask 670720
        %v986 = vsel %vm985, %v983, %v984
        %v988 = vmul.f32 %v980, %v986
        %990 = vrot.lane.b32.xlu0 %v988, 78
        %v991 = vpop.permute.xlu0 %990
        %v992 = vrot.slane %v991, 6
        %v993 = vsel %vm934, %v992, %v991
        %v995 = vadd.f32 %v978, %v993
        %s996 = sld [smem:[#allocation7 + $0xab]]
        %v997 = vstv %s996
        %v998 = vmul.f32 %v997, %v986
        %v1000 = vrot.slane %v998, 7
        %v1001 = vrot.slane %v1000, 2
        %1002 = vrot.lane.b32.xlu0 %v1001, 78
        %v1003 = vpop.permute.xlu0 %1002
        %v1004 = vrot.slane %v1003, 6
        %v1005 = vsel %vm934, %v1004, %v1003
        %v1007 = vadd.f32 %v995, %v1005
        %vm1008 = vcmp.ge.s32.totalorder %v636, 2
        %vm1009 = vcmp.ge.s32.totalorder %v637, 2
        %vm1010 = vcmp.lt.s32.totalorder %v636, 18
        %vm1011 = vcmp.lt.s32.totalorder %v637, 18
        %vm1012 = vmand %vm1008, %vm1010
        %vm1013 = vmand %vm1009, %vm1011
        %v1015 = vlaneseq
        %v1016 = vshrl.u32 %v1015, 7
        %v1017 = vsub.s32 0, %v1016
        %v1018 = vrot.slane %v1007, %v1017
        %v1019 = vlaneseq
        %v1020 = vshrl.u32 %v1019, 7
        %v1021 = vsub.s32 2, %v1020
        %v1022 = vrot.slane %v1007, %v1021
        %v1023 = vlaneseq
        %v1024 = vshrl.u32 %v1023, 7
        %v1025 = vsub.s32 4, %v1024
        %v1026 = vrot.slane %v1007, %v1025
        %1027 = vrot.lane.b32.xlu0 %v1018, 50
        %v1028 = vpop.permute.xlu0 %1027
        %1029 = vrot.lane.b32.xlu0 %v1022, 50
        %v1030 = vpop.permute.xlu0 %1029
        %1031 = vrot.lane.b32.xlu0 %v1026, 50
        %v1032 = vpop.permute.xlu0 %1031
        %vm1033 = vcmask 408576
        %v1034 = vsel %vm1033, %v1028, %v1030
        %v1035 = vsel %vm1033, %v1030, %v1032
        %v1038 = vsel %vm1012, %v1034, 0.0
        %v1039 = vsel %vm1013, %v1035, 0.0
        %v1040 = vadd.f32 %v840, %v1038
        %v1041 = vadd.f32 %v841, %v1039
        %s1042 = sld [smem:[#allocation7 + $0x2]]
        %v1043 = vstv %s1042
        %v1044 = vmul.f32 %v1043, %v612
        %v1045 = vadd.f32 %v1044, 0.0
        %s1046 = sld [smem:[#allocation7 + $0x82]]
        %v1047 = vstv %s1046
        %v1048 = vmul.f32 %v1047, %v612
        %v1050 = vrot.slane %v1048, 7
        %v1051 = vrot.slane %v1050, 2
        %v1053 = vadd.f32 %v1045, %v1051
        %s1054 = sld [smem:[#allocation7 + $0x9]]
        %v1055 = vstv %s1054
        %v1056 = vmul.f32 %v1055, %v612
        %1058 = vrot.lane.b32.xlu0 %v1056, 112
        %v1059 = vpop.permute.xlu0 %1058
        %v1060 = vrot.slane %v1059, 2
        %v1061 = vsel %vm657, %v1059, %v1060
        %v1063 = vadd.f32 %v1053, %v1061
        %s1064 = sld [smem:[#allocation7 + $0x89]]
        %v1065 = vstv %s1064
        %v1066 = vmul.f32 %v1065, %v612
        %v1068 = vrot.slane %v1066, 7
        %v1069 = vrot.slane %v1068, 2
        %1070 = vrot.lane.b32.xlu0 %v1069, 112
        %v1071 = vpop.permute.xlu0 %1070
        %v1072 = vrot.slane %v1071, 2
        %v1073 = vsel %vm657, %v1071, %v1072
        %v1075 = vadd.f32 %v1063, %v1073
        %s1076 = sld [smem:[#allocation7 + $0x10]]
        %v1077 = vstv %s1076
        %v1078 = vmul.f32 %v1077, %v612
        %1080 = vrot.lane.b32.xlu0 %v1078, 96
        %v1081 = vpop.permute.xlu0 %1080
        %v1082 = vrot.slane %v1081, 2
        %v1083 = vsel %vm680, %v1081, %v1082
        %v1085 = vadd.f32 %v1075, %v1083
        %s1086 = sld [smem:[#allocation7 + $0x90]]
        %v1087 = vstv %s1086
        %v1088 = vmul.f32 %v1087, %v612
        %v1090 = vrot.slane %v1088, 7
        %v1091 = vrot.slane %v1090, 2
        %1092 = vrot.lane.b32.xlu0 %v1091, 96
        %v1093 = vpop.permute.xlu0 %1092
        %v1094 = vrot.slane %v1093, 2
        %v1095 = vsel %vm680, %v1093, %v1094
        %v1097 = vadd.f32 %v1085, %v1095
        %s1098 = sld [smem:[#allocation7 + $0x17]]
        %v1099 = vstv %s1098
        %v1100 = vmul.f32 %v1099, %v612
        %1102 = vrot.lane.b32.xlu0 %v1100, 80
        %v1103 = vpop.permute.xlu0 %1102
        %v1104 = vrot.slane %v1103, 2
        %v1105 = vsel %vm703, %v1103, %v1104
        %v1107 = vadd.f32 %v1097, %v1105
        %s1108 = sld [smem:[#allocation7 + $0x97]]
        %v1109 = vstv %s1108
        %v1110 = vmul.f32 %v1109, %v612
        %v1112 = vrot.slane %v1110, 7
        %v1113 = vrot.slane %v1112, 2
        %1114 = vrot.lane.b32.xlu0 %v1113, 80
        %v1115 = vpop.permute.xlu0 %1114
        %v1116 = vrot.slane %v1115, 2
        %v1117 = vsel %vm703, %v1115, %v1116
        %v1119 = vadd.f32 %v1107, %v1117
        %s1120 = sld [smem:[#allocation7 + $0x1e]]
        %v1121 = vstv %s1120
        %1122 = vrot.lane.b32.xlu0 %v612, 113
        %v1123 = vpop.permute.xlu0 %1122
        %v1124 = vrot.slane %v1123, 2
        %v1125 = vrot.slane %v1123, 4
        %vm1126 = vcmask 924672
        %v1127 = vsel %vm1126, %v1124, %v1125
        %v1129 = vmul.f32 %v1121, %v1127
        %1131 = vrot.lane.b32.xlu0 %v1129, 79
        %v1132 = vpop.permute.xlu0 %1131
        %v1133 = vrot.slane %v1132, 6
        %vm1134 = vcmask 646144
        %v1135 = vsel %vm1134, %v1133, %v1132
        %v1137 = vadd.f32 %v1119, %v1135
        %s1138 = sld [smem:[#allocation7 + $0x9e]]
        %v1139 = vstv %s1138
        %v1140 = vmul.f32 %v1139, %v1127
        %v1142 = vrot.slane %v1140, 7
        %v1143 = vrot.slane %v1142, 2
        %1144 = vrot.lane.b32.xlu0 %v1143, 79
        %v1145 = vpop.permute.xlu0 %1144
        %v1146 = vrot.slane %v1145, 6
        %v1147 = vsel %vm1134, %v1146, %v1145
        %v1149 = vadd.f32 %v1137, %v1147
        %s1150 = sld [smem:[#allocation7 + $0x25]]
        %v1151 = vstv %s1150
        %1152 = vrot.lane.b32.xlu0 %v612, 97
        %v1153 = vpop.permute.xlu0 %1152
        %v1154 = vrot.slane %v1153, 2
        %v1155 = vrot.slane %v1153, 4
        %vm1156 = vcmask 793600
        %v1157 = vsel %vm1156, %v1154, %v1155
        %v1159 = vmul.f32 %v1151, %v1157
        %1161 = vrot.lane.b32.xlu0 %v1159, 79
        %v1162 = vpop.permute.xlu0 %1161
        %v1163 = vrot.slane %v1162, 6
        %v1164 = vsel %vm1134, %v1163, %v1162
        %v1166 = vadd.f32 %v1149, %v1164
        %s1167 = sld [smem:[#allocation7 + $0xa5]]
        %v1168 = vstv %s1167
        %v1169 = vmul.f32 %v1168, %v1157
        %v1171 = vrot.slane %v1169, 7
        %v1172 = vrot.slane %v1171, 2
        %1173 = vrot.lane.b32.xlu0 %v1172, 79
        %v1174 = vpop.permute.xlu0 %1173
        %v1175 = vrot.slane %v1174, 6
        %v1176 = vsel %vm1134, %v1175, %v1174
        %v1178 = vadd.f32 %v1166, %v1176
        %s1179 = sld [smem:[#allocation7 + $0x2c]]
        %v1180 = vstv %s1179
        %1181 = vrot.lane.b32.xlu0 %v612, 81
        %v1182 = vpop.permute.xlu0 %1181
        %v1183 = vrot.slane %v1182, 2
        %v1184 = vrot.slane %v1182, 4
        %vm1185 = vcmask 662528
        %v1186 = vsel %vm1185, %v1183, %v1184
        %v1188 = vmul.f32 %v1180, %v1186
        %1190 = vrot.lane.b32.xlu0 %v1188, 79
        %v1191 = vpop.permute.xlu0 %1190
        %v1192 = vrot.slane %v1191, 6
        %v1193 = vsel %vm1134, %v1192, %v1191
        %v1195 = vadd.f32 %v1178, %v1193
        %s1196 = sld [smem:[#allocation7 + $0xac]]
        %v1197 = vstv %s1196
        %v1198 = vmul.f32 %v1197, %v1186
        %v1200 = vrot.slane %v1198, 7
        %v1201 = vrot.slane %v1200, 2
        %1202 = vrot.lane.b32.xlu0 %v1201, 79
        %v1203 = vpop.permute.xlu0 %1202
        %v1204 = vrot.slane %v1203, 6
        %v1205 = vsel %vm1134, %v1204, %v1203
        %v1207 = vadd.f32 %v1195, %v1205
        %vm1208 = vcmp.ge.s32.totalorder %v636, 1
        %vm1209 = vcmp.ge.s32.totalorder %v637, 1
        %vm1210 = vcmp.lt.s32.totalorder %v636, 17
        %vm1211 = vcmp.lt.s32.totalorder %v637, 17
        %vm1212 = vmand %vm1208, %vm1210
        %vm1213 = vmand %vm1209, %vm1211
        %v1215 = vlaneseq
        %v1216 = vshrl.u32 %v1215, 7
        %v1217 = vsub.s32 0, %v1216
        %v1218 = vrot.slane %v1207, %v1217
        %v1219 = vlaneseq
        %v1220 = vshrl.u32 %v1219, 7
        %v1221 = vsub.s32 2, %v1220
        %v1222 = vrot.slane %v1207, %v1221
        %v1223 = vlaneseq
        %v1224 = vshrl.u32 %v1223, 7
        %v1225 = vsub.s32 4, %v1224
        %v1226 = vrot.slane %v1207, %v1225
        %1227 = vrot.lane.b32.xlu0 %v1218, 49
        %v1228 = vpop.permute.xlu0 %1227
        %1229 = vrot.lane.b32.xlu0 %v1222, 49
        %v1230 = vpop.permute.xlu0 %1229
        %1231 = vrot.lane.b32.xlu0 %v1226, 49
        %v1232 = vpop.permute.xlu0 %1231
        %vm1233 = vcmask 400384
        %v1234 = vsel %vm1233, %v1228, %v1230
        %v1235 = vsel %vm1233, %v1230, %v1232
        %v1238 = vsel %vm1212, %v1234, 0.0
        %v1239 = vsel %vm1213, %v1235, 0.0
        %v1240 = vadd.f32 %v1040, %v1238
        %v1241 = vadd.f32 %v1041, %v1239
        %s1242 = sld [smem:[#allocation7 + $0x3]]
        %v1243 = vstv %s1242
        %v1244 = vmul.f32 %v1243, %v612
        %v1245 = vadd.f32 %v1244, 0.0
        %s1246 = sld [smem:[#allocation7 + $0x83]]
        %v1247 = vstv %s1246
        %v1248 = vmul.f32 %v1247, %v612
        %v1250 = vrot.slane %v1248, 7
        %v1251 = vrot.slane %v1250, 2
        %v1253 = vadd.f32 %v1245, %v1251
        %s1254 = sld [smem:[#allocation7 + $0xa]]
        %v1255 = vstv %s1254
        %v1256 = vmul.f32 %v1255, %v612
        %1258 = vrot.lane.b32.xlu0 %v1256, 112
        %v1259 = vpop.permute.xlu0 %1258
        %v1260 = vrot.slane %v1259, 2
        %v1261 = vsel %vm657, %v1259, %v1260
        %v1263 = vadd.f32 %v1253, %v1261
        %s1264 = sld [smem:[#allocation7 + $0x8a]]
        %v1265 = vstv %s1264
        %v1266 = vmul.f32 %v1265, %v612
        %v1268 = vrot.slane %v1266, 7
        %v1269 = vrot.slane %v1268, 2
        %1270 = vrot.lane.b32.xlu0 %v1269, 112
        %v1271 = vpop.permute.xlu0 %1270
        %v1272 = vrot.slane %v1271, 2
        %v1273 = vsel %vm657, %v1271, %v1272
        %v1275 = vadd.f32 %v1263, %v1273
        %s1276 = sld [smem:[#allocation7 + $0x11]]
        %v1277 = vstv %s1276
        %v1278 = vmul.f32 %v1277, %v612
        %1280 = vrot.lane.b32.xlu0 %v1278, 96
        %v1281 = vpop.permute.xlu0 %1280
        %v1282 = vrot.slane %v1281, 2
        %v1283 = vsel %vm680, %v1281, %v1282
        %v1285 = vadd.f32 %v1275, %v1283
        %s1286 = sld [smem:[#allocation7 + $0x91]]
        %v1287 = vstv %s1286
        %v1288 = vmul.f32 %v1287, %v612
        %v1290 = vrot.slane %v1288, 7
        %v1291 = vrot.slane %v1290, 2
        %1292 = vrot.lane.b32.xlu0 %v1291, 96
        %v1293 = vpop.permute.xlu0 %1292
        %v1294 = vrot.slane %v1293, 2
        %v1295 = vsel %vm680, %v1293, %v1294
        %v1297 = vadd.f32 %v1285, %v1295
        %s1298 = sld [smem:[#allocation7 + $0x18]]
        %v1299 = vstv %s1298
        %v1300 = vrot.slane %v612, 2
        %v1302 = vmul.f32 %v1299, %v1300
        %1304 = vrot.lane.b32.xlu0 %v1302, 80
        %v1305 = vpop.permute.xlu0 %1304
        %v1306 = vrot.slane %v1305, 6
        %v1307 = vsel %vm703, %v1306, %v1305
        %v1309 = vadd.f32 %v1297, %v1307
        %s1310 = sld [smem:[#allocation7 + $0x98]]
        %v1311 = vstv %s1310
        %v1312 = vmul.f32 %v1311, %v1300
        %v1314 = vrot.slane %v1312, 7
        %v1315 = vrot.slane %v1314, 2
        %1316 = vrot.lane.b32.xlu0 %v1315, 80
        %v1317 = vpop.permute.xlu0 %1316
        %v1318 = vrot.slane %v1317, 6
        %v1319 = vsel %vm703, %v1318, %v1317
        %v1321 = vadd.f32 %v1309, %v1319
        %s1322 = sld [smem:[#allocation7 + $0x1f]]
        %v1323 = vstv %s1322
        %1324 = vrot.lane.b32.xlu0 %v612, 112
        %v1325 = vpop.permute.xlu0 %1324
        %v1326 = vrot.slane %v1325, 2
        %v1327 = vrot.slane %v1325, 4
        %v1328 = vsel %vm657, %v1326, %v1327
        %v1330 = vmul.f32 %v1323, %v1328
        %1332 = vrot.lane.b32.xlu0 %v1330, 80
        %v1333 = vpop.permute.xlu0 %1332
        %v1334 = vrot.slane %v1333, 6
        %v1335 = vsel %vm703, %v1334, %v1333
        %v1337 = vadd.f32 %v1321, %v1335
        %s1338 = sld [smem:[#allocation7 + $0x9f]]
        %v1339 = vstv %s1338
        %v1340 = vmul.f32 %v1339, %v1328
        %v1342 = vrot.slane %v1340, 7
        %v1343 = vrot.slane %v1342, 2
        %1344 = vrot.lane.b32.xlu0 %v1343, 80
        %v1345 = vpop.permute.xlu0 %1344
        %v1346 = vrot.slane %v1345, 6
        %v1347 = vsel %vm703, %v1346, %v1345
        %v1349 = vadd.f32 %v1337, %v1347
        %s1350 = sld [smem:[#allocation7 + $0x26]]
        %v1351 = vstv %s1350
        %1352 = vrot.lane.b32.xlu0 %v612, 96
        %v1353 = vpop.permute.xlu0 %1352
        %v1354 = vrot.slane %v1353, 2
        %v1355 = vrot.slane %v1353, 4
        %v1356 = vsel %vm680, %v1354, %v1355
        %v1358 = vmul.f32 %v1351, %v1356
        %1360 = vrot.lane.b32.xlu0 %v1358, 80
        %v1361 = vpop.permute.xlu0 %1360
        %v1362 = vrot.slane %v1361, 6
        %v1363 = vsel %vm703, %v1362, %v1361
        %v1365 = vadd.f32 %v1349, %v1363
        %s1366 = sld [smem:[#allocation7 + $0xa6]]
        %v1367 = vstv %s1366
        %v1368 = vmul.f32 %v1367, %v1356
        %v1370 = vrot.slane %v1368, 7
        %v1371 = vrot.slane %v1370, 2
        %1372 = vrot.lane.b32.xlu0 %v1371, 80
        %v1373 = vpop.permute.xlu0 %1372
        %v1374 = vrot.slane %v1373, 6
        %v1375 = vsel %vm703, %v1374, %v1373
        %v1377 = vadd.f32 %v1365, %v1375
        %s1378 = sld [smem:[#allocation7 + $0x2d]]
        %v1379 = vstv %s1378
        %1380 = vrot.lane.b32.xlu0 %v612, 80
        %v1381 = vpop.permute.xlu0 %1380
        %v1382 = vrot.slane %v1381, 2
        %v1383 = vrot.slane %v1381, 4
        %v1384 = vsel %vm703, %v1382, %v1383
        %v1386 = vmul.f32 %v1379, %v1384
        %1388 = vrot.lane.b32.xlu0 %v1386, 80
        %v1389 = vpop.permute.xlu0 %1388
        %v1390 = vrot.slane %v1389, 6
        %v1391 = vsel %vm703, %v1390, %v1389
        %v1393 = vadd.f32 %v1377, %v1391
        %s1394 = sld [smem:[#allocation7 + $0xad]]
        %v1395 = vstv %s1394
        %v1396 = vmul.f32 %v1395, %v1384
        %v1398 = vrot.slane %v1396, 7
        %v1399 = vrot.slane %v1398, 2
        %1400 = vrot.lane.b32.xlu0 %v1399, 80
        %v1401 = vpop.permute.xlu0 %1400
        %v1402 = vrot.slane %v1401, 6
        %v1403 = vsel %vm703, %v1402, %v1401
        %v1405 = vadd.f32 %v1393, %v1403
        %vm1406 = vcmp.ge.s32.totalorder %v636, 0
        %vm1407 = vcmp.ge.s32.totalorder %v637, 0
        %vm1408 = vcmp.lt.s32.totalorder %v636, 16
        %vm1409 = vcmp.lt.s32.totalorder %v637, 16
        %vm1410 = vmand %vm1406, %vm1408
        %vm1411 = vmand %vm1407, %vm1409
        %v1413 = vlaneseq
        %v1414 = vshrl.u32 %v1413, 7
        %v1415 = vsub.s32 0, %v1414
        %v1416 = vrot.slane %v1405, %v1415
        %v1417 = vlaneseq
        %v1418 = vshrl.u32 %v1417, 7
        %v1419 = vsub.s32 2, %v1418
        %v1420 = vrot.slane %v1405, %v1419
        %v1421 = vlaneseq
        %v1422 = vshrl.u32 %v1421, 7
        %v1423 = vsub.s32 4, %v1422
        %v1424 = vrot.slane %v1405, %v1423
        %1425 = vrot.lane.b32.xlu0 %v1416, 48
        %v1426 = vpop.permute.xlu0 %1425
        %1427 = vrot.lane.b32.xlu0 %v1420, 48
        %v1428 = vpop.permute.xlu0 %1427
        %1429 = vrot.lane.b32.xlu0 %v1424, 48
        %v1430 = vpop.permute.xlu0 %1429
        %vm1431 = vcmask 392192
        %v1432 = vsel %vm1431, %v1426, %v1428
        %v1433 = vsel %vm1431, %v1428, %v1430
        %v1436 = vsel %vm1410, %v1432, 0.0
        %v1437 = vsel %vm1411, %v1433, 0.0
        %v1438 = vadd.f32 %v1240, %v1436
        %v1439 = vadd.f32 %v1241, %v1437
        %s1440 = sld [smem:[#allocation7 + $0x4]]
        %v1441 = vstv %s1440
        %v1442 = vmul.f32 %v1441, %v612
        %v1443 = vadd.f32 %v1442, 0.0
        %s1444 = sld [smem:[#allocation7 + $0x84]]
        %v1445 = vstv %s1444
        %v1446 = vmul.f32 %v1445, %v612
        %v1448 = vrot.slane %v1446, 7
        %v1449 = vrot.slane %v1448, 2
        %v1451 = vadd.f32 %v1443, %v1449
        %s1452 = sld [smem:[#allocation7 + $0xb]]
        %v1453 = vstv %s1452
        %v1454 = vmul.f32 %v1453, %v612
        %1456 = vrot.lane.b32.xlu0 %v1454, 112
        %v1457 = vpop.permute.xlu0 %1456
        %v1458 = vrot.slane %v1457, 2
        %v1459 = vsel %vm657, %v1457, %v1458
        %v1461 = vadd.f32 %v1451, %v1459
        %s1462 = sld [smem:[#allocation7 + $0x8b]]
        %v1463 = vstv %s1462
        %v1464 = vmul.f32 %v1463, %v612
        %v1466 = vrot.slane %v1464, 7
        %v1467 = vrot.slane %v1466, 2
        %1468 = vrot.lane.b32.xlu0 %v1467, 112
        %v1469 = vpop.permute.xlu0 %1468
        %v1470 = vrot.slane %v1469, 2
        %v1471 = vsel %vm657, %v1469, %v1470
        %v1473 = vadd.f32 %v1461, %v1471
        %s1474 = sld [smem:[#allocation7 + $0x12]]
        %v1475 = vstv %s1474
        %v1476 = vmul.f32 %v1475, %v612
        %1478 = vrot.lane.b32.xlu0 %v1476, 96
        %v1479 = vpop.permute.xlu0 %1478
        %v1480 = vrot.slane %v1479, 2
        %v1481 = vsel %vm680, %v1479, %v1480
        %v1483 = vadd.f32 %v1473, %v1481
        %s1484 = sld [smem:[#allocation7 + $0x92]]
        %v1485 = vstv %s1484
        %v1486 = vmul.f32 %v1485, %v612
        %v1488 = vrot.slane %v1486, 7
        %v1489 = vrot.slane %v1488, 2
        %1490 = vrot.lane.b32.xlu0 %v1489, 96
        %v1491 = vpop.permute.xlu0 %1490
        %v1492 = vrot.slane %v1491, 2
        %v1493 = vsel %vm680, %v1491, %v1492
        %v1495 = vadd.f32 %v1483, %v1493
        %s1496 = sld [smem:[#allocation7 + $0x19]]
        %v1497 = vstv %s1496
        %1498 = vrot.lane.b32.xlu0 %v612, 127
        %v1499 = vpop.permute.xlu0 %1498
        %v1500 = vrot.slane %v1499, 2
        %v1501 = vrot.slane %v1499, 4
        %vm1502 = vcmask 1039360
        %v1503 = vsel %vm1502, %v1500, %v1501
        %v1505 = vmul.f32 %v1497, %v1503
        %1507 = vrot.lane.b32.xlu0 %v1505, 81
        %v1508 = vpop.permute.xlu0 %1507
        %v1509 = vrot.slane %v1508, 6
        %v1510 = vsel %vm1185, %v1509, %v1508
        %v1512 = vadd.f32 %v1495, %v1510
        %s1513 = sld [smem:[#allocation7 + $0x99]]
        %v1514 = vstv %s1513
        %v1515 = vmul.f32 %v1514, %v1503
        %v1517 = vrot.slane %v1515, 7
        %v1518 = vrot.slane %v1517, 2
        %1519 = vrot.lane.b32.xlu0 %v1518, 81
        %v1520 = vpop.permute.xlu0 %1519
        %v1521 = vrot.slane %v1520, 6
        %v1522 = vsel %vm1185, %v1521, %v1520
        %v1524 = vadd.f32 %v1512, %v1522
        %s1525 = sld [smem:[#allocation7 + $0x20]]
        %v1526 = vstv %s1525
        %1527 = vrot.lane.b32.xlu0 %v612, 111
        %v1528 = vpop.permute.xlu0 %1527
        %v1529 = vrot.slane %v1528, 2
        %v1530 = vrot.slane %v1528, 4
        %vm1531 = vcmask 908288
        %v1532 = vsel %vm1531, %v1529, %v1530
        %v1534 = vmul.f32 %v1526, %v1532
        %1536 = vrot.lane.b32.xlu0 %v1534, 81
        %v1537 = vpop.permute.xlu0 %1536
        %v1538 = vrot.slane %v1537, 6
        %v1539 = vsel %vm1185, %v1538, %v1537
        %v1541 = vadd.f32 %v1524, %v1539
        %s1542 = sld [smem:[#allocation7 + $0xa0]]
        %v1543 = vstv %s1542
        %v1544 = vmul.f32 %v1543, %v1532
        %v1546 = vrot.slane %v1544, 7
        %v1547 = vrot.slane %v1546, 2
        %1548 = vrot.lane.b32.xlu0 %v1547, 81
        %v1549 = vpop.permute.xlu0 %1548
        %v1550 = vrot.slane %v1549, 6
        %v1551 = vsel %vm1185, %v1550, %v1549
        %v1553 = vadd.f32 %v1541, %v1551
        %s1554 = sld [smem:[#allocation7 + $0x27]]
        %v1555 = vstv %s1554
        %1556 = vrot.lane.b32.xlu0 %v612, 95
        %v1557 = vpop.permute.xlu0 %1556
        %v1558 = vrot.slane %v1557, 2
        %v1559 = vrot.slane %v1557, 4
        %vm1560 = vcmask 777216
        %v1561 = vsel %vm1560, %v1558, %v1559
        %v1563 = vmul.f32 %v1555, %v1561
        %1565 = vrot.lane.b32.xlu0 %v1563, 81
        %v1566 = vpop.permute.xlu0 %1565
        %v1567 = vrot.slane %v1566, 6
        %v1568 = vsel %vm1185, %v1567, %v1566
        %v1570 = vadd.f32 %v1553, %v1568
        %s1571 = sld [smem:[#allocation7 + $0xa7]]
        %v1572 = vstv %s1571
        %v1573 = vmul.f32 %v1572, %v1561
        %v1575 = vrot.slane %v1573, 7
        %v1576 = vrot.slane %v1575, 2
        %1577 = vrot.lane.b32.xlu0 %v1576, 81
        %v1578 = vpop.permute.xlu0 %1577
        %v1579 = vrot.slane %v1578, 6
        %v1580 = vsel %vm1185, %v1579, %v1578
        %v1582 = vadd.f32 %v1570, %v1580
        %s1583 = sld [smem:[#allocation7 + $0x2e]]
        %v1584 = vstv %s1583
        %1585 = vrot.lane.b32.xlu0 %v612, 79
        %v1586 = vpop.permute.xlu0 %1585
        %v1587 = vrot.slane %v1586, 2
        %v1588 = vrot.slane %v1586, 4
        %v1589 = vsel %vm1134, %v1587, %v1588
        %v1591 = vmul.f32 %v1584, %v1589
        %1593 = vrot.lane.b32.xlu0 %v1591, 81
        %v1594 = vpop.permute.xlu0 %1593
        %v1595 = vrot.slane %v1594, 6
        %v1596 = vsel %vm1185, %v1595, %v1594
        %v1598 = vadd.f32 %v1582, %v1596
        %s1599 = sld [smem:[#allocation7 + $0xae]]
        %v1600 = vstv %s1599
        %v1601 = vmul.f32 %v1600, %v1589
        %v1603 = vrot.slane %v1601, 7
        %v1604 = vrot.slane %v1603, 2
        %1605 = vrot.lane.b32.xlu0 %v1604, 81
        %v1606 = vpop.permute.xlu0 %1605
        %v1607 = vrot.slane %v1606, 6
        %v1608 = vsel %vm1185, %v1607, %v1606
        %v1610 = vadd.f32 %v1598, %v1608
        %vm1611 = vcmp.ge.s32.totalorder %v636, 4294967295
        %vm1612 = vcmp.ge.s32.totalorder %v637, 4294967295
        %vm1613 = vcmp.lt.s32.totalorder %v636, 15
        %vm1614 = vcmp.lt.s32.totalorder %v637, 15
        %vm1615 = vmand %vm1611, %vm1613
        %vm1616 = vmand %vm1612, %vm1614
        %v1618 = vlaneseq
        %v1619 = vshrl.u32 %v1618, 7
        %v1620 = vsub.s32 0, %v1619
        %v1621 = vrot.slane %v1610, %v1620
        %v1622 = vlaneseq
        %v1623 = vshrl.u32 %v1622, 7
        %v1624 = vsub.s32 2, %v1623
        %v1625 = vrot.slane %v1610, %v1624
        %v1626 = vlaneseq
        %v1627 = vshrl.u32 %v1626, 7
        %v1628 = vsub.s32 4, %v1627
        %v1629 = vrot.slane %v1610, %v1628
        %1630 = vrot.lane.b32.xlu0 %v1621, 47
        %v1631 = vpop.permute.xlu0 %1630
        %1632 = vrot.lane.b32.xlu0 %v1625, 47
        %v1633 = vpop.permute.xlu0 %1632
        %1634 = vrot.lane.b32.xlu0 %v1629, 47
        %v1635 = vpop.permute.xlu0 %1634
        %vm1636 = vcmask 384000
        %v1637 = vsel %vm1636, %v1631, %v1633
        %v1638 = vsel %vm1636, %v1633, %v1635
        %v1641 = vsel %vm1615, %v1637, 0.0
        %v1642 = vsel %vm1616, %v1638, 0.0
        %v1643 = vadd.f32 %v1438, %v1641
        %v1644 = vadd.f32 %v1439, %v1642
        %s1645 = sld [smem:[#allocation7 + $0x5]]
        %v1646 = vstv %s1645
        %v1647 = vmul.f32 %v1646, %v612
        %v1648 = vadd.f32 %v1647, 0.0
        %s1649 = sld [smem:[#allocation7 + $0x85]]
        %v1650 = vstv %s1649
        %v1651 = vmul.f32 %v1650, %v612
        %v1653 = vrot.slane %v1651, 7
        %v1654 = vrot.slane %v1653, 2
        %v1656 = vadd.f32 %v1648, %v1654
        %s1657 = sld [smem:[#allocation7 + $0xc]]
        %v1658 = vstv %s1657
        %v1659 = vmul.f32 %v1658, %v612
        %1661 = vrot.lane.b32.xlu0 %v1659, 112
        %v1662 = vpop.permute.xlu0 %1661
        %v1663 = vrot.slane %v1662, 2
        %v1664 = vsel %vm657, %v1662, %v1663
        %v1666 = vadd.f32 %v1656, %v1664
        %s1667 = sld [smem:[#allocation7 + $0x8c]]
        %v1668 = vstv %s1667
        %v1669 = vmul.f32 %v1668, %v612
        %v1671 = vrot.slane %v1669, 7
        %v1672 = vrot.slane %v1671, 2
        %1673 = vrot.lane.b32.xlu0 %v1672, 112
        %v1674 = vpop.permute.xlu0 %1673
        %v1675 = vrot.slane %v1674, 2
        %v1676 = vsel %vm657, %v1674, %v1675
        %v1678 = vadd.f32 %v1666, %v1676
        %s1679 = sld [smem:[#allocation7 + $0x13]]
        %v1680 = vstv %s1679
        %v1681 = vmul.f32 %v1680, %v612
        %1683 = vrot.lane.b32.xlu0 %v1681, 96
        %v1684 = vpop.permute.xlu0 %1683
        %v1685 = vrot.slane %v1684, 2
        %v1686 = vsel %vm680, %v1684, %v1685
        %v1688 = vadd.f32 %v1678, %v1686
        %s1689 = sld [smem:[#allocation7 + $0x93]]
        %v1690 = vstv %s1689
        %v1691 = vmul.f32 %v1690, %v612
        %v1693 = vrot.slane %v1691, 7
        %v1694 = vrot.slane %v1693, 2
        %1695 = vrot.lane.b32.xlu0 %v1694, 96
        %v1696 = vpop.permute.xlu0 %1695
        %v1697 = vrot.slane %v1696, 2
        %v1698 = vsel %vm680, %v1696, %v1697
        %v1700 = vadd.f32 %v1688, %v1698
        %s1701 = sld [smem:[#allocation7 + $0x1a]]
        %v1702 = vstv %s1701
        %1703 = vrot.lane.b32.xlu0 %v612, 126
        %v1704 = vpop.permute.xlu0 %1703
        %v1705 = vrot.slane %v1704, 2
        %v1706 = vrot.slane %v1704, 4
        %vm1707 = vcmask 1031168
        %v1708 = vsel %vm1707, %v1705, %v1706
        %v1710 = vmul.f32 %v1702, %v1708
        %1712 = vrot.lane.b32.xlu0 %v1710, 82
        %v1713 = vpop.permute.xlu0 %1712
        %v1714 = vrot.slane %v1713, 6
        %v1715 = vsel %vm985, %v1714, %v1713
        %v1717 = vadd.f32 %v1700, %v1715
        %s1718 = sld [smem:[#allocation7 + $0x9a]]
        %v1719 = vstv %s1718
        %v1720 = vmul.f32 %v1719, %v1708
        %v1722 = vrot.slane %v1720, 7
        %v1723 = vrot.slane %v1722, 2
        %1724 = vrot.lane.b32.xlu0 %v1723, 82
        %v1725 = vpop.permute.xlu0 %1724
        %v1726 = vrot.slane %v1725, 6
        %v1727 = vsel %vm985, %v1726, %v1725
        %v1729 = vadd.f32 %v1717, %v1727
        %s1730 = sld [smem:[#allocation7 + $0x21]]
        %v1731 = vstv %s1730
        %1732 = vrot.lane.b32.xlu0 %v612, 110
        %v1733 = vpop.permute.xlu0 %1732
        %v1734 = vrot.slane %v1733, 2
        %v1735 = vrot.slane %v1733, 4
        %vm1736 = vcmask 900096
        %v1737 = vsel %vm1736, %v1734, %v1735
        %v1739 = vmul.f32 %v1731, %v1737
        %1741 = vrot.lane.b32.xlu0 %v1739, 82
        %v1742 = vpop.permute.xlu0 %1741
        %v1743 = vrot.slane %v1742, 6
        %v1744 = vsel %vm985, %v1743, %v1742
        %v1746 = vadd.f32 %v1729, %v1744
        %s1747 = sld [smem:[#allocation7 + $0xa1]]
        %v1748 = vstv %s1747
        %v1749 = vmul.f32 %v1748, %v1737
        %v1751 = vrot.slane %v1749, 7
        %v1752 = vrot.slane %v1751, 2
        %1753 = vrot.lane.b32.xlu0 %v1752, 82
        %v1754 = vpop.permute.xlu0 %1753
        %v1755 = vrot.slane %v1754, 6
        %v1756 = vsel %vm985, %v1755, %v1754
        %v1758 = vadd.f32 %v1746, %v1756
        %s1759 = sld [smem:[#allocation7 + $0x28]]
        %v1760 = vstv %s1759
        %1761 = vrot.lane.b32.xlu0 %v612, 94
        %v1762 = vpop.permute.xlu0 %1761
        %v1763 = vrot.slane %v1762, 2
        %v1764 = vrot.slane %v1762, 4
        %vm1765 = vcmask 769024
        %v1766 = vsel %vm1765, %v1763, %v1764
        %v1768 = vmul.f32 %v1760, %v1766
        %1770 = vrot.lane.b32.xlu0 %v1768, 82
        %v1771 = vpop.permute.xlu0 %1770
        %v1772 = vrot.slane %v1771, 6
        %v1773 = vsel %vm985, %v1772, %v1771
        %v1775 = vadd.f32 %v1758, %v1773
        %s1776 = sld [smem:[#allocation7 + $0xa8]]
        %v1777 = vstv %s1776
        %v1778 = vmul.f32 %v1777, %v1766
        %v1780 = vrot.slane %v1778, 7
        %v1781 = vrot.slane %v1780, 2
        %1782 = vrot.lane.b32.xlu0 %v1781, 82
        %v1783 = vpop.permute.xlu0 %1782
        %v1784 = vrot.slane %v1783, 6
        %v1785 = vsel %vm985, %v1784, %v1783
        %v1787 = vadd.f32 %v1775, %v1785
        %s1788 = sld [smem:[#allocation7 + $0x2f]]
        %v1789 = vstv %s1788
        %1790 = vrot.lane.b32.xlu0 %v612, 78
        %v1791 = vpop.permute.xlu0 %1790
        %v1792 = vrot.slane %v1791, 2
        %v1793 = vrot.slane %v1791, 4
        %v1794 = vsel %vm934, %v1792, %v1793
        %v1796 = vmul.f32 %v1789, %v1794
        %1798 = vrot.lane.b32.xlu0 %v1796, 82
        %v1799 = vpop.permute.xlu0 %1798
        %v1800 = vrot.slane %v1799, 6
        %v1801 = vsel %vm985, %v1800, %v1799
        %v1803 = vadd.f32 %v1787, %v1801
        %s1804 = sld [smem:[#allocation7 + $0xaf]]
        %v1805 = vstv %s1804
        %v1806 = vmul.f32 %v1805, %v1794
        %v1808 = vrot.slane %v1806, 7
        %v1809 = vrot.slane %v1808, 2
        %1810 = vrot.lane.b32.xlu0 %v1809, 82
        %v1811 = vpop.permute.xlu0 %1810
        %v1812 = vrot.slane %v1811, 6
        %v1813 = vsel %vm985, %v1812, %v1811
        %v1815 = vadd.f32 %v1803, %v1813
        %vm1816 = vcmp.ge.s32.totalorder %v636, 4294967294
        %vm1817 = vcmp.ge.s32.totalorder %v637, 4294967294
        %vm1818 = vcmp.lt.s32.totalorder %v636, 14
        %vm1819 = vcmp.lt.s32.totalorder %v637, 14
        %vm1820 = vmand %vm1816, %vm1818
        %vm1821 = vmand %vm1817, %vm1819
        %v1823 = vlaneseq
        %v1824 = vshrl.u32 %v1823, 7
        %v1825 = vsub.s32 0, %v1824
        %v1826 = vrot.slane %v1815, %v1825
        %v1827 = vlaneseq
        %v1828 = vshrl.u32 %v1827, 7
        %v1829 = vsub.s32 2, %v1828
        %v1830 = vrot.slane %v1815, %v1829
        %v1831 = vlaneseq
        %v1832 = vshrl.u32 %v1831, 7
        %v1833 = vsub.s32 4, %v1832
        %v1834 = vrot.slane %v1815, %v1833
        %1835 = vrot.lane.b32.xlu0 %v1826, 46
        %v1836 = vpop.permute.xlu0 %1835
        %1837 = vrot.lane.b32.xlu0 %v1830, 46
        %v1838 = vpop.permute.xlu0 %1837
        %1839 = vrot.lane.b32.xlu0 %v1834, 46
        %v1840 = vpop.permute.xlu0 %1839
        %vm1841 = vcmask 375808
        %v1842 = vsel %vm1841, %v1836, %v1838
        %v1843 = vsel %vm1841, %v1838, %v1840
        %v1846 = vsel %vm1820, %v1842, 0.0
        %v1847 = vsel %vm1821, %v1843, 0.0
        %v1848 = vadd.f32 %v1643, %v1846
        %v1849 = vadd.f32 %v1644, %v1847
        %s1850 = sld [smem:[#allocation7 + $0x6]]
        %v1851 = vstv %s1850
        %v1852 = vmul.f32 %v1851, %v612
        %v1853 = vadd.f32 %v1852, 0.0
        %s1854 = sld [smem:[#allocation7 + $0x86]]
        %v1855 = vstv %s1854
        %v1856 = vmul.f32 %v1855, %v612
        %v1858 = vrot.slane %v1856, 7
        %v1859 = vrot.slane %v1858, 2
        %v1861 = vadd.f32 %v1853, %v1859
        %s1862 = sld [smem:[#allocation7 + $0xd]]
        %v1863 = vstv %s1862
        %v1864 = vmul.f32 %v1863, %v612
        %1866 = vrot.lane.b32.xlu0 %v1864, 112
        %v1867 = vpop.permute.xlu0 %1866
        %v1868 = vrot.slane %v1867, 2
        %v1869 = vsel %vm657, %v1867, %v1868
        %v1871 = vadd.f32 %v1861, %v1869
        %s1872 = sld [smem:[#allocation7 + $0x8d]]
        %v1873 = vstv %s1872
        %v1874 = vmul.f32 %v1873, %v612
        %v1876 = vrot.slane %v1874, 7
        %v1877 = vrot.slane %v1876, 2
        %1878 = vrot.lane.b32.xlu0 %v1877, 112
        %v1879 = vpop.permute.xlu0 %1878
        %v1880 = vrot.slane %v1879, 2
        %v1881 = vsel %vm657, %v1879, %v1880
        %v1883 = vadd.f32 %v1871, %v1881
        %s1884 = sld [smem:[#allocation7 + $0x14]]
        %v1885 = vstv %s1884
        %v1886 = vmul.f32 %v1885, %v612
        %1888 = vrot.lane.b32.xlu0 %v1886, 96
        %v1889 = vpop.permute.xlu0 %1888
        %v1890 = vrot.slane %v1889, 2
        %v1891 = vsel %vm680, %v1889, %v1890
        %v1893 = vadd.f32 %v1883, %v1891
        %s1894 = sld [smem:[#allocation7 + $0x94]]
        %v1895 = vstv %s1894
        %v1896 = vmul.f32 %v1895, %v612
        %v1898 = vrot.slane %v1896, 7
        %v1899 = vrot.slane %v1898, 2
        %1900 = vrot.lane.b32.xlu0 %v1899, 96
        %v1901 = vpop.permute.xlu0 %1900
        %v1902 = vrot.slane %v1901, 2
        %v1903 = vsel %vm680, %v1901, %v1902
        %v1905 = vadd.f32 %v1893, %v1903
        %s1906 = sld [smem:[#allocation7 + $0x1b]]
        %v1907 = vstv %s1906
        %1908 = vrot.lane.b32.xlu0 %v612, 125
        %v1909 = vpop.permute.xlu0 %1908
        %v1910 = vrot.slane %v1909, 2
        %v1911 = vrot.slane %v1909, 4
        %vm1912 = vcmask 1022976
        %v1913 = vsel %vm1912, %v1910, %v1911
        %v1915 = vmul.f32 %v1907, %v1913
        %1917 = vrot.lane.b32.xlu0 %v1915, 83
        %v1918 = vpop.permute.xlu0 %1917
        %v1919 = vrot.slane %v1918, 6
        %v1920 = vsel %vm785, %v1919, %v1918
        %v1922 = vadd.f32 %v1905, %v1920
        %s1923 = sld [smem:[#allocation7 + $0x9b]]
        %v1924 = vstv %s1923
        %v1925 = vmul.f32 %v1924, %v1913
        %v1927 = vrot.slane %v1925, 7
        %v1928 = vrot.slane %v1927, 2
        %1929 = vrot.lane.b32.xlu0 %v1928, 83
        %v1930 = vpop.permute.xlu0 %1929
        %v1931 = vrot.slane %v1930, 6
        %v1932 = vsel %vm785, %v1931, %v1930
        %v1934 = vadd.f32 %v1922, %v1932
        %s1935 = sld [smem:[#allocation7 + $0x22]]
        %v1936 = vstv %s1935
        %1937 = vrot.lane.b32.xlu0 %v612, 109
        %v1938 = vpop.permute.xlu0 %1937
        %v1939 = vrot.slane %v1938, 2
        %v1940 = vrot.slane %v1938, 4
        %vm1941 = vcmask 891904
        %v1942 = vsel %vm1941, %v1939, %v1940
        %v1944 = vmul.f32 %v1936, %v1942
        %1946 = vrot.lane.b32.xlu0 %v1944, 83
        %v1947 = vpop.permute.xlu0 %1946
        %v1948 = vrot.slane %v1947, 6
        %v1949 = vsel %vm785, %v1948, %v1947
        %v1951 = vadd.f32 %v1934, %v1949
        %s1952 = sld [smem:[#allocation7 + $0xa2]]
        %v1953 = vstv %s1952
        %v1954 = vmul.f32 %v1953, %v1942
        %v1956 = vrot.slane %v1954, 7
        %v1957 = vrot.slane %v1956, 2
        %1958 = vrot.lane.b32.xlu0 %v1957, 83
        %v1959 = vpop.permute.xlu0 %1958
        %v1960 = vrot.slane %v1959, 6
        %v1961 = vsel %vm785, %v1960, %v1959
        %v1963 = vadd.f32 %v1951, %v1961
        %s1964 = sld [smem:[#allocation7 + $0x29]]
        %v1965 = vstv %s1964
        %1966 = vrot.lane.b32.xlu0 %v612, 93
        %v1967 = vpop.permute.xlu0 %1966
        %v1968 = vrot.slane %v1967, 2
        %v1969 = vrot.slane %v1967, 4
        %vm1970 = vcmask 760832
        %v1971 = vsel %vm1970, %v1968, %v1969
        %v1973 = vmul.f32 %v1965, %v1971
        %1975 = vrot.lane.b32.xlu0 %v1973, 83
        %v1976 = vpop.permute.xlu0 %1975
        %v1977 = vrot.slane %v1976, 6
        %v1978 = vsel %vm785, %v1977, %v1976
        %v1980 = vadd.f32 %v1963, %v1978
        %s1981 = sld [smem:[#allocation7 + $0xa9]]
        %v1982 = vstv %s1981
        %v1983 = vmul.f32 %v1982, %v1971
        %v1985 = vrot.slane %v1983, 7
        %v1986 = vrot.slane %v1985, 2
        %1987 = vrot.lane.b32.xlu0 %v1986, 83
        %v1988 = vpop.permute.xlu0 %1987
        %v1989 = vrot.slane %v1988, 6
        %v1990 = vsel %vm785, %v1989, %v1988
        %v1992 = vadd.f32 %v1980, %v1990
        %s1993 = sld [smem:[#allocation7 + $0x30]]
        %v1994 = vstv %s1993
        %1995 = vrot.lane.b32.xlu0 %v612, 77
        %v1996 = vpop.permute.xlu0 %1995
        %v1997 = vrot.slane %v1996, 2
        %v1998 = vrot.slane %v1996, 4
        %v1999 = vsel %vm734, %v1997, %v1998
        %v2001 = vmul.f32 %v1994, %v1999
        %2003 = vrot.lane.b32.xlu0 %v2001, 83
        %v2004 = vpop.permute.xlu0 %2003
        %v2005 = vrot.slane %v2004, 6
        %v2006 = vsel %vm785, %v2005, %v2004
        %v2008 = vadd.f32 %v1992, %v2006
        %s2009 = sld [smem:[#allocation7 + $0xb0]]
        %v2010 = vstv %s2009
        %v2011 = vmul.f32 %v2010, %v1999
        %v2013 = vrot.slane %v2011, 7
        %v2014 = vrot.slane %v2013, 2
        %2015 = vrot.lane.b32.xlu0 %v2014, 83
        %v2016 = vpop.permute.xlu0 %2015
        %v2017 = vrot.slane %v2016, 6
        %v2018 = vsel %vm785, %v2017, %v2016
        %v2020 = vadd.f32 %v2008, %v2018
        %vm2021 = vcmp.ge.s32.totalorder %v636, 4294967293
        %vm2022 = vcmp.ge.s32.totalorder %v637, 4294967293
        %vm2023 = vcmp.lt.s32.totalorder %v636, 13
        %vm2024 = vcmp.lt.s32.totalorder %v637, 13
        %vm2025 = vmand %vm2021, %vm2023
        %vm2026 = vmand %vm2022, %vm2024
        %v2028 = vlaneseq
        %v2029 = vshrl.u32 %v2028, 7
        %v2030 = vsub.s32 0, %v2029
        %v2031 = vrot.slane %v2020, %v2030
        %v2032 = vlaneseq
        %v2033 = vshrl.u32 %v2032, 7
        %v2034 = vsub.s32 2, %v2033
        %v2035 = vrot.slane %v2020, %v2034
        %v2036 = vlaneseq
        %v2037 = vshrl.u32 %v2036, 7
        %v2038 = vsub.s32 4, %v2037
        %v2039 = vrot.slane %v2020, %v2038
        %2040 = vrot.lane.b32.xlu0 %v2031, 45
        %v2041 = vpop.permute.xlu0 %2040
        %2042 = vrot.lane.b32.xlu0 %v2035, 45
        %v2043 = vpop.permute.xlu0 %2042
        %2044 = vrot.lane.b32.xlu0 %v2039, 45
        %v2045 = vpop.permute.xlu0 %2044
        %vm2046 = vcmask 367616
        %v2047 = vsel %vm2046, %v2041, %v2043
        %v2048 = vsel %vm2046, %v2043, %v2045
        %v2051 = vsel %vm2025, %v2047, 0.0
        %v2052 = vsel %vm2026, %v2048, 0.0
        %v2053 = vadd.f32 %v1848, %v2051
        %v2054 = vadd.f32 %v1849, %v2052
        %v2055 = vxor.u32 %v2053, 2147483648
        %v2056 = vxor.u32 %v2054, 2147483648
        %v2057 = vmul.f32 %v2055, 1.442695
        %v2058 = vpow.pop %v2057
        %v2059 = vmul.f32 %v2056, 1.442695
        %v2060 = vpow.pop %v2059
        %v2061 = vadd.f32 %v2058, 1.0
        %v2062 = vadd.f32 %v2060, 1.0
        %v2063 = vrcp.pop %v2061
        %v2064 = vmul.f32 1.0, %v2063
        %v2065 = vrcp.pop %v2062
        %v2066 = vmul.f32 1.0, %v2065
        %v2067 = vlaneseq
        %v2068 = vshrl.u32 %v2067, 7
        %v2069 = vsub.s32 0, %v2068
        %v2070 = vrot.slane %v2064, %v2069
        %v2071 = vlaneseq
        %v2072 = vshrl.u32 %v2071, 7
        %v2073 = vsub.s32 0, %v2072
        %v2074 = vrot.slane %v2066, %v2073
        %v2075 = vmul.f32 %v520, %v2070
        %v2076 = vmul.f32 %v521, %v2074
        %v2077 = vmul.f32 %v522, %v2070
        %v2078 = vmul.f32 %v523, %v2074
        %v2079 = vmul.f32 %v524, %v2070
        %v2080 = vmul.f32 %v525, %v2074
        %v2081 = vmul.f32 %v526, %v2070
        %v2082 = vmul.f32 %v527, %v2074
        %2083 = vst [vmem:[%s229] sm:$0xff] %v2075
        %2084 = vst [vmem:[%s229 + $0x8] sm:$0xff] %v2076
        %2085 = vst [vmem:[%s229 + $0x10] sm:$0xff] %v2077
        %2086 = vst [vmem:[%s229 + $0x18] sm:$0xff] %v2078
        %2087 = vst [vmem:[%s229 + $0x20] sm:$0xff] %v2079
        %2088 = vst [vmem:[%s229 + $0x28] sm:$0xff] %v2080
        %2089 = vst [vmem:[%s229 + $0x30] sm:$0xff] %v2081
        %2090 = vst [vmem:[%s229 + $0x38] sm:$0xff] %v2082
        %s2091 = sand.u32 %s119, 1
        %s2092 = scalar_lea.sflag [#allocation5], %s2091
        %s2093 = sand.u32 %s119, 1
        %s2094 = smul.addr %s2093, 64
        %s2095 = scalar_lea.vmem [#allocation8], %s2094
        // Predicated region
        $region45: #{tpu_custom_call.1} parent=35 // pred_check
          %p2096 = pneg %p129
        $region46: #{tpu_custom_call.1} parent=35 // pred_check_branch
          %2098 = sbr.rel (%p2096) target = $region48
        $region47: #{tpu_custom_call.1} parent=35 // pred_region
          %s2100 = ssub.s32 1024, 1024
          %2101 = vsyncadd %s2092, %s2100
          %s2102 = smul.addr %s22, 8
          %s2103 = smul.addr %s2102, 128
          %s2104 = scalar_lea.hbm %s4, %s2103
          %s2105 = sshll.u32 %s2095, 4
          %s2106 = int_to_ptr.vmem [resolvable:$true] %s2105
          %2111 = dma.vmem_to_hbm [thread:$0]  %s2106, 1024, %s2104, %s2092, 256, 256, 16
        $region48: #{tpu_custom_call.1} parent=35 // pred_fallthru
          _
      $region36: #{tpu_custom_call.1} parent=5 // pred_fallthru
        _
      %p2112 = scmp.le.s32.totalorder 2, %s17
      // Predicated region
      $region49: #{tpu_custom_call.1} parent=5 // pred_check
        %p2113 = pneg %p2112
      $region50: #{tpu_custom_call.1} parent=5 // pred_check_branch
        %2115 = sbr.rel (%p2113) target = $region52
      $region51: #{tpu_custom_call.1} parent=5 // pred_region
        %s2116 = ssub.s32 %s17, 2
        // Predicated region
        $region53: #{tpu_custom_call.1} parent=51 // pred_check
          %p2117 = pneg %p135
        $region54: #{tpu_custom_call.1} parent=51 // pred_check_branch
          %2119 = sbr.rel (%p2117) target = $region56
        $region55: #{tpu_custom_call.1} parent=51 // pred_region
          %s2120 = sand.u32 %s120, 1
          %s2121 = scalar_lea.sflag [#allocation5], %s2120
          %s2122 = sand.u32 %s120, 1
          %s2123 = smul.addr %s2122, 64
          %s2124 = scalar_lea.vmem [#allocation8], %s2123
          %2125 = dma.done %s2121, 1024
        $region56: #{tpu_custom_call.1} parent=51 // pred_fallthru
          _
      $region52: #{tpu_custom_call.1} parent=5 // pred_fallthru
        _
    $region6: #{tpu_custom_call.1} parent=1 // loop_footer
      %s21 = sadd.s32 1, %s17
    $region7: #{tpu_custom_call.1} parent=1 // loop_footer_branch
      %16 = sbr.rel target = $region3
    $region8: #{tpu_custom_call.1} parent=1 // loop_exit
      _
    %2126 = vsyncpa [#allocation4], 1
    %s2127 = scalar_lea.sflag [#allocation4], 1
    %2128 = vsyncpa %s2127, 1
    %2129 = vsyncpa [#allocation5], 1
    %s2130 = scalar_lea.sflag [#allocation5], 1
    %2131 = vsyncpa %s2130, 1
    %2132 = vsyncpa [#allocation6], 1
    %s2133 = scalar_lea.sflag [#allocation6], 1
    %2134 = vsyncpa %s2133, 1

</llo_original>
